<compile_context>
chip_gen: v6e
topology: v6e:2x2x1
jax: 0.10.0
libtpu: 0.0.40
codegen_flags: <defaults>
</compile_context>

<pallas_src>
import jax
import jax.numpy as jnp
from jax.experimental import pallas as pl
from jax.experimental.pallas import tpu as pltpu

H = 16
W = 16
HW = H * W

ZNEAR = 1e-4
AMBIENT = 0.3
DIFFUSE = 0.7
BG = (1.0, 1.0, 1.0)           # white background

_SENTINEL = 0x7F800000         # int32 bit pattern of +inf: "no face hit"


# --------------------------------------------------------------------------
# Fused rasterize + shade kernel.  One grid step renders a block of `bblk`
# batch elements (statically unrolled); per element everything stays in
# registers and is written back as one (8, HW) slab.
# --------------------------------------------------------------------------
def _render_kernel(pix_ref, faces_ref, out_ref):
    bblk, num_faces, _ = faces_ref.shape
    id_bits = max(1, (num_faces - 1).bit_length())
    id_mask = (1 << id_bits) - 1
    hi_mask = jnp.int32(~id_mask)

    pix = pix_ref[...]                            # (2, HW) constant NDC coords
    px = pix[0:1, :]
    py = pix[1:2, :]

    for b in range(bblk):                          # static unroll (bblk <= 2)
        fvb = faces_ref[b]                         # (F, 27) merged face table
        # NDC vertices
        x0, y0, z0 = fvb[:, 0:1], fvb[:, 1:2], fvb[:, 2:3]
        x1, y1, z1 = fvb[:, 3:4], fvb[:, 4:5], fvb[:, 5:6]
        x2, y2, z2 = fvb[:, 6:7], fvb[:, 7:8], fvb[:, 8:9]

        # --- shader prologue (per-face, tiny): flat headlight shading ---
        wv = fvb[:, 9:18]                          # world vertices
        e1x = wv[:, 3:4] - wv[:, 0:1]
        e1y = wv[:, 4:5] - wv[:, 1:2]
        e1z = wv[:, 5:6] - wv[:, 2:3]
        e2x = wv[:, 6:7] - wv[:, 0:1]
        e2y = wv[:, 7:8] - wv[:, 1:2]
        e2z = wv[:, 8:9] - wv[:, 2:3]
        nx = e1y * e2z - e1z * e2y
        ny = e1z * e2x - e1x * e2z
        nz = e1x * e2y - e1y * e2x
        inv_n = jax.lax.rsqrt(nx * nx + ny * ny + nz * nz + 1e-12)
        shade = AMBIENT + DIFFUSE * jnp.maximum(nz * inv_n, 0.0)      # (F, 1)
        fcs = fvb[:, 18:27] * shade                                   # (F, 9)

        # --- rasterizer: barycentrics of every pixel w.r.t. every face ---
        d = (y1 - y2) * (x0 - x2) + (x2 - x1) * (y0 - y2)             # (F, 1)
        denom_ok = jnp.abs(d) > 1e-8
        dinv = jnp.where(denom_ok, 1.0 / jnp.where(denom_ok, d, 1.0), 0.0)
        w0 = ((y1 - y2) * (px - x2) + (x2 - x1) * (py - y2)) * dinv   # (F, HW)
        w1 = ((y2 - y0) * (px - x2) + (x0 - x2) * (py - y2)) * dinv
        w2 = 1.0 - w0 - w1
        z = w0 * z0 + w1 * z1 + w2 * z2                               # (F, HW)
        inside = ((w0 >= 0.0) & (w1 >= 0.0) & (w2 >= 0.0)
                  & denom_ok & (z > ZNEAR))

        # --- fused hard z-buffer min + argmin via packed integer key ---
        face_ids = jax.lax.broadcasted_iota(jnp.int32, (num_faces, HW), 0)
        zkey = (pltpu.bitcast(z, jnp.int32) & hi_mask) | face_ids
        zkey = jnp.where(inside, zkey, jnp.int32(_SENTINEL))
        kmin = jnp.min(zkey, axis=0, keepdims=True)                   # (1, HW)
        hit = kmin < _SENTINEL
        fidx = jnp.where(hit, kmin & jnp.int32(id_mask), -1)          # (1, HW)
        zmin = pltpu.bitcast(kmin & hi_mask, jnp.float32)             # (1, HW)
        win = inside & (zkey == kmin)                                 # one-hot

        # winner barycentrics (w0..w2 die here)
        l0 = jnp.sum(jnp.where(win, w0, 0.0), axis=0, keepdims=True)
        l1 = jnp.sum(jnp.where(win, w1, 0.0), axis=0, keepdims=True)
        l2 = jnp.sum(jnp.where(win, w2, 0.0), axis=0, keepdims=True)

        # MXU gather of winner's 9 shaded vertex colors (win dies here)
        win_f = win.astype(jnp.float32)
        sel = jax.lax.dot_general(                                    # (9, HW)
            fcs, win_f,
            dimension_numbers=(((0,), (0,)), ((), ())),
            preferred_element_type=jnp.float32)

        # --- assemble the packed 8-row output slab and store it once ---
        rows = []
        for c in range(3):
            col = (sel[c:c + 1, :] * l0 +
                   sel[3 + c:4 + c, :] * l1 +
                   sel[6 + c:7 + c, :] * l2)
            rows.append(jnp.where(hit, col, BG[c]))
        rows.append(jnp.where(hit, zmin, -1.0))
        rows.append(jnp.where(hit, l0, -1.0))
        rows.append(jnp.where(hit, l1, -1.0))
        rows.append(jnp.where(hit, l2, -1.0))
        rows.append(pltpu.bitcast(fidx, jnp.float32))  # int bits in f32 slab
        out_ref[b] = jnp.concatenate(rows, axis=0)     # single (8, HW) store


# --------------------------------------------------------------------------
# Wrapper = MeshRendererWithFragments.forward (single fused pallas_call)
# --------------------------------------------------------------------------
def _pixel_centers():
    # NDC pixel centers, flat pixel index p = i*W + j; row 0 = px, row 1 = py.
    jj = jnp.tile(jnp.arange(W, dtype=jnp.float32), H)
    ii = jnp.repeat(jnp.arange(H, dtype=jnp.float32), W)
    px = 2.0 * (jj + 0.5) / W - 1.0
    py = 1.0 - 2.0 * (ii + 0.5) / H
    return jnp.stack([px, py], axis=0)                 # (2, HW)


def mesh_renderer_with_fragments(face_verts_ndc, face_verts_world, face_colors):
    B, F, _ = face_verts_ndc.shape
    # One merged face table -> one input DMA stream per grid step.
    faces = jnp.concatenate([face_verts_ndc, face_verts_world, face_colors],
                            axis=-1)                   # (B, F, 27)
    pix = _pixel_centers()

    # v7x has 2 TensorCores/chip: split the batch across them (CORE_PARALLEL).
    # Single-TC chips (v5e/v6e): one fat grid step to halve per-step overhead.
    device_kind = jax.devices()[0].device_kind.lower()
    num_tc = 2 if "v7" in device_kind else 1
    steps = num_tc if (num_tc > 1 and B % num_tc == 0) else 1
    bblk = B // steps
    dim_sem = (pltpu.CORE_PARALLEL,) if steps > 1 else ("arbitrary",)

    packed = pl.pallas_call(
        _render_kernel,
        grid=(steps,),
        in_specs=[
            pl.BlockSpec((2, HW), lambda s: (0, 0)),          # constant coords
            pl.BlockSpec((bblk, F, 27), lambda s: (s, 0, 0)),  # merged faces
        ],
        out_specs=pl.BlockSpec((bblk, 8, HW), lambda s: (s, 0, 0)),
        out_shape=jax.ShapeDtypeStruct((B, 8, HW), jnp.float32),
        compiler_params=pltpu.CompilerParams(dimension_semantics=dim_sem),
    )(pix, faces)

    # glue: unpack the 8-row slab back to PyTorch3D-style outputs.
    rgb = packed[:, 0:3, :].reshape(B, 3, H, W).transpose(0, 2, 3, 1)
    p2f = jax.lax.bitcast_convert_type(packed[:, 7, :],
                                       jnp.int32).reshape(B, H, W, 1)
    alpha = (p2f >= 0).astype(jnp.float32)
    images = jnp.concatenate([rgb, alpha], axis=-1)            # (B, H, W, 4)
    fragments = {
        "pix_to_face": p2f,
        "zbuf": packed[:, 3, :].reshape(B, H, W, 1),
        "bary_coords": packed[:, 4:7, :].reshape(B, 3, H, W)
                            .transpose(0, 2, 3, 1).reshape(B, H, W, 1, 3),
    }
    return images, fragments


# --------------------------------------------------------------------------
# Deterministic synthetic "meshes_world": a cube per batch element.
# --------------------------------------------------------------------------
def _build_inputs(key, B):
    corners = jnp.array(
        [[x, y, z] for x in (-0.5, 0.5) for y in (-0.5, 0.5) for z in (-0.5, 0.5)],
        dtype=jnp.float32)                                    # (8, 3)
    faces = jnp.array(
        [[0, 1, 3], [0, 3, 2],    # -x
         [4, 6, 7], [4, 7, 5],    # +x
         [0, 4, 5], [0, 5, 1],    # -y
         [2, 3, 7], [2, 7, 6],    # +y
         [0, 2, 6], [0, 6, 4],    # -z
         [1, 5, 7], [1, 7, 3]],   # +z
        dtype=jnp.int32)                                      # (12, 3)
    F = faces.shape[0]

    verts_list = []
    for b in range(B):
        ang = 0.4 + 0.3 * b
        c, s = jnp.cos(ang), jnp.sin(ang)
        rot = jnp.array([[c, 0.0, s], [0.0, 1.0, 0.0], [-s, 0.0, c]], jnp.float32)
        scale = 1.0 + 0.2 * b
        v = (corners * scale) @ rot.T + jnp.array([0.0, 0.0, 2.0], jnp.float32)
        verts_list.append(v)
    verts_world = jnp.stack(verts_list, axis=0)               # (B, 8, 3)

    # orthographic projection to NDC: x_ndc = x, y_ndc = y, z = world z (> 0)
    verts_ndc = verts_world
    verts_rgb = jax.random.uniform(key, (B, corners.shape[0], 3), jnp.float32)

    face_verts_world = verts_world[:, faces, :].reshape(B, F, 9)
    face_verts_ndc = verts_ndc[:, faces, :].reshape(B, F, 9)
    face_colors = verts_rgb[:, faces, :].reshape(B, F, 9)
    return face_verts_ndc, face_verts_world, face_colors


if __name__ == "__main__":
    key = jax.random.PRNGKey(0)
    B = 2
    face_verts_ndc, face_verts_world, face_colors = _build_inputs(key, B)

    images, fragments = jax.jit(mesh_renderer_with_fragments)(
        face_verts_ndc, face_verts_world, face_colors)
    jax.block_until_ready((images, fragments))

    assert images.shape == (B, H, W, 4)
    assert fragments["pix_to_face"].shape == (B, H, W, 1)
    assert fragments["zbuf"].shape == (B, H, W, 1)
    assert fragments["bary_coords"].shape == (B, H, W, 1, 3)
    # at least some pixels should be covered by the cube
    assert float(jnp.sum(images[..., 3])) > 0.0
    # background pixels are flagged -1 everywhere
    bg = fragments["pix_to_face"][..., 0] < 0
    assert bool(jnp.all(jnp.where(bg, fragments["zbuf"][..., 0], -1.0) == -1.0))
    print("KERNEL_OK")
</pallas_src>

<mosaic_0001>
module attributes {stable_mosaic.version = 11 : i64} {
  func.func @_render_kernel(%arg0: i32, %arg1: memref<2x256xf32, #tpu.memory_space<vmem>>, %arg2: memref<2x12x27xf32, #tpu.memory_space<vmem>>, %arg3: memref<2x8x256xf32, #tpu.memory_space<vmem>>) attributes {dimension_semantics = [#tpu.dimension_semantics<arbitrary>], iteration_bounds = array<i64: 1>, scalar_prefetch = 0 : i64, scratch_operands = 0 : i64, tpu.core_type = #tpu.core_type<tc>, window_params = [{pipeline_mode = #tpu.pipeline_mode<synchronous>, transform_indices = @transform_0, window_bounds = array<i64: 2, 256>}, {transform_indices = @transform_1, window_bounds = array<i64: 2, 12, 27>}, {transform_indices = @transform_2, window_bounds = array<i64: 2, 8, 256>}]} {
    %c0 = arith.constant 0 : index
    %c0_0 = arith.constant 0 : index
    %0 = vector.load %arg1[%c0, %c0_0] : memref<2x256xf32, #tpu.memory_space<vmem>>, vector<2x256xf32>
    %1 = vector.extract_strided_slice %0 {offsets = [0, 0], sizes = [1, 256], strides = [1, 1]} : vector<2x256xf32> to vector<1x256xf32>
    %2 = vector.extract_strided_slice %0 {offsets = [1, 0], sizes = [1, 256], strides = [1, 1]} : vector<2x256xf32> to vector<1x256xf32>
    %c0_1 = arith.constant 0 : index
    %c0_2 = arith.constant 0 : index
    %c0_3 = arith.constant 0 : index
    %3 = vector.load %arg2[%c0_1, %c0_2, %c0_3] : memref<2x12x27xf32, #tpu.memory_space<vmem>>, vector<1x12x27xf32>
    %4 = vector.shape_cast %3 : vector<1x12x27xf32> to vector<12x27xf32>
    %5 = vector.extract_strided_slice %4 {offsets = [0, 0], sizes = [12, 1], strides = [1, 1]} : vector<12x27xf32> to vector<12x1xf32>
    %6 = vector.extract_strided_slice %4 {offsets = [0, 1], sizes = [12, 1], strides = [1, 1]} : vector<12x27xf32> to vector<12x1xf32>
    %7 = vector.extract_strided_slice %4 {offsets = [0, 2], sizes = [12, 1], strides = [1, 1]} : vector<12x27xf32> to vector<12x1xf32>
    %8 = vector.extract_strided_slice %4 {offsets = [0, 3], sizes = [12, 1], strides = [1, 1]} : vector<12x27xf32> to vector<12x1xf32>
    %9 = vector.extract_strided_slice %4 {offsets = [0, 4], sizes = [12, 1], strides = [1, 1]} : vector<12x27xf32> to vector<12x1xf32>
    %10 = vector.extract_strided_slice %4 {offsets = [0, 5], sizes = [12, 1], strides = [1, 1]} : vector<12x27xf32> to vector<12x1xf32>
    %11 = vector.extract_strided_slice %4 {offsets = [0, 6], sizes = [12, 1], strides = [1, 1]} : vector<12x27xf32> to vector<12x1xf32>
    %12 = vector.extract_strided_slice %4 {offsets = [0, 7], sizes = [12, 1], strides = [1, 1]} : vector<12x27xf32> to vector<12x1xf32>
    %13 = vector.extract_strided_slice %4 {offsets = [0, 8], sizes = [12, 1], strides = [1, 1]} : vector<12x27xf32> to vector<12x1xf32>
    %14 = vector.extract_strided_slice %4 {offsets = [0, 9], sizes = [12, 9], strides = [1, 1]} : vector<12x27xf32> to vector<12x9xf32>
    %15 = vector.extract_strided_slice %14 {offsets = [0, 3], sizes = [12, 1], strides = [1, 1]} : vector<12x9xf32> to vector<12x1xf32>
    %16 = vector.extract_strided_slice %14 {offsets = [0, 0], sizes = [12, 1], strides = [1, 1]} : vector<12x9xf32> to vector<12x1xf32>
    %17 = arith.subf %15, %16 : vector<12x1xf32>
    %18 = vector.extract_strided_slice %14 {offsets = [0, 4], sizes = [12, 1], strides = [1, 1]} : vector<12x9xf32> to vector<12x1xf32>
    %19 = vector.extract_strided_slice %14 {offsets = [0, 1], sizes = [12, 1], strides = [1, 1]} : vector<12x9xf32> to vector<12x1xf32>
    %20 = arith.subf %18, %19 : vector<12x1xf32>
    %21 = vector.extract_strided_slice %14 {offsets = [0, 5], sizes = [12, 1], strides = [1, 1]} : vector<12x9xf32> to vector<12x1xf32>
    %22 = vector.extract_strided_slice %14 {offsets = [0, 2], sizes = [12, 1], strides = [1, 1]} : vector<12x9xf32> to vector<12x1xf32>
    %23 = arith.subf %21, %22 : vector<12x1xf32>
    %24 = vector.extract_strided_slice %14 {offsets = [0, 6], sizes = [12, 1], strides = [1, 1]} : vector<12x9xf32> to vector<12x1xf32>
    %25 = vector.extract_strided_slice %14 {offsets = [0, 0], sizes = [12, 1], strides = [1, 1]} : vector<12x9xf32> to vector<12x1xf32>
    %26 = arith.subf %24, %25 : vector<12x1xf32>
    %27 = vector.extract_strided_slice %14 {offsets = [0, 7], sizes = [12, 1], strides = [1, 1]} : vector<12x9xf32> to vector<12x1xf32>
    %28 = vector.extract_strided_slice %14 {offsets = [0, 1], sizes = [12, 1], strides = [1, 1]} : vector<12x9xf32> to vector<12x1xf32>
    %29 = arith.subf %27, %28 : vector<12x1xf32>
    %30 = vector.extract_strided_slice %14 {offsets = [0, 8], sizes = [12, 1], strides = [1, 1]} : vector<12x9xf32> to vector<12x1xf32>
    %31 = vector.extract_strided_slice %14 {offsets = [0, 2], sizes = [12, 1], strides = [1, 1]} : vector<12x9xf32> to vector<12x1xf32>
    %32 = arith.subf %30, %31 : vector<12x1xf32>
    %33 = arith.mulf %20, %32 : vector<12x1xf32>
    %34 = arith.mulf %23, %29 : vector<12x1xf32>
    %35 = arith.subf %33, %34 : vector<12x1xf32>
    %36 = arith.mulf %23, %26 : vector<12x1xf32>
    %37 = arith.mulf %17, %32 : vector<12x1xf32>
    %38 = arith.subf %36, %37 : vector<12x1xf32>
    %39 = arith.mulf %17, %29 : vector<12x1xf32>
    %40 = arith.mulf %20, %26 : vector<12x1xf32>
    %41 = arith.subf %39, %40 : vector<12x1xf32>
    %42 = arith.mulf %35, %35 : vector<12x1xf32>
    %43 = arith.mulf %38, %38 : vector<12x1xf32>
    %44 = arith.addf %42, %43 : vector<12x1xf32>
    %45 = arith.mulf %41, %41 : vector<12x1xf32>
    %46 = arith.addf %44, %45 : vector<12x1xf32>
    %cst = arith.constant 9.99999996E-13 : f32
    %47 = vector.broadcast %cst : f32 to vector<12x1xf32>
    %48 = arith.addf %46, %47 : vector<12x1xf32>
    %49 = math.rsqrt %48 : vector<12x1xf32>
    %50 = arith.mulf %41, %49 : vector<12x1xf32>
    %cst_4 = arith.constant 0.000000e+00 : f32
    %51 = vector.broadcast %cst_4 : f32 to vector<12x1xf32>
    %52 = arith.maximumf %50, %51 : vector<12x1xf32>
    %cst_5 = arith.constant 0.699999988 : f32
    %53 = vector.broadcast %cst_5 : f32 to vector<12x1xf32>
    %54 = arith.mulf %53, %52 : vector<12x1xf32>
    %cst_6 = arith.constant 3.000000e-01 : f32
    %55 = vector.broadcast %cst_6 : f32 to vector<12x1xf32>
    %56 = arith.addf %55, %54 : vector<12x1xf32>
    %57 = vector.extract_strided_slice %4 {offsets = [0, 18], sizes = [12, 9], strides = [1, 1]} : vector<12x27xf32> to vector<12x9xf32>
    %58 = vector.broadcast %56 : vector<12x1xf32> to vector<12x9xf32>
    %59 = arith.mulf %57, %58 : vector<12x9xf32>
    %60 = arith.subf %9, %12 : vector<12x1xf32>
    %61 = arith.subf %5, %11 : vector<12x1xf32>
    %62 = arith.mulf %60, %61 : vector<12x1xf32>
    %63 = arith.subf %11, %8 : vector<12x1xf32>
    %64 = arith.subf %6, %12 : vector<12x1xf32>
    %65 = arith.mulf %63, %64 : vector<12x1xf32>
    %66 = arith.addf %62, %65 : vector<12x1xf32>
    %67 = math.absf %66 : vector<12x1xf32>
    %cst_7 = arith.constant 9.99999993E-9 : f32
    %68 = vector.broadcast %cst_7 : f32 to vector<12x1xf32>
    %69 = arith.cmpf ogt, %67, %68 : vector<12x1xf32>
    %cst_8 = arith.constant 1.000000e+00 : f32
    %70 = vector.broadcast %cst_8 : f32 to vector<12x1xf32>
    %71 = arith.select %69, %66, %70 : vector<12x1xi1>, vector<12x1xf32>
    %cst_9 = arith.constant 1.000000e+00 : f32
    %72 = vector.broadcast %cst_9 : f32 to vector<12x1xf32>
    %73 = arith.divf %72, %71 : vector<12x1xf32>
    %cst_10 = arith.constant 0.000000e+00 : f32
    %74 = vector.broadcast %cst_10 : f32 to vector<12x1xf32>
    %75 = arith.select %69, %73, %74 : vector<12x1xi1>, vector<12x1xf32>
    %76 = arith.subf %9, %12 : vector<12x1xf32>
    %77 = vector.broadcast %1 : vector<1x256xf32> to vector<12x256xf32>
    %78 = vector.broadcast %11 : vector<12x1xf32> to vector<12x256xf32>
    %79 = arith.subf %77, %78 : vector<12x256xf32>
    %80 = vector.broadcast %76 : vector<12x1xf32> to vector<12x256xf32>
    %81 = arith.mulf %80, %79 : vector<12x256xf32>
    %82 = arith.subf %11, %8 : vector<12x1xf32>
    %83 = vector.broadcast %2 : vector<1x256xf32> to vector<12x256xf32>
    %84 = vector.broadcast %12 : vector<12x1xf32> to vector<12x256xf32>
    %85 = arith.subf %83, %84 : vector<12x256xf32>
    %86 = vector.broadcast %82 : vector<12x1xf32> to vector<12x256xf32>
    %87 = arith.mulf %86, %85 : vector<12x256xf32>
    %88 = arith.addf %81, %87 : vector<12x256xf32>
    %89 = vector.broadcast %75 : vector<12x1xf32> to vector<12x256xf32>
    %90 = arith.mulf %88, %89 : vector<12x256xf32>
    %91 = arith.subf %12, %6 : vector<12x1xf32>
    %92 = vector.broadcast %1 : vector<1x256xf32> to vector<12x256xf32>
    %93 = vector.broadcast %11 : vector<12x1xf32> to vector<12x256xf32>
    %94 = arith.subf %92, %93 : vector<12x256xf32>
    %95 = vector.broadcast %91 : vector<12x1xf32> to vector<12x256xf32>
    %96 = arith.mulf %95, %94 : vector<12x256xf32>
    %97 = arith.subf %5, %11 : vector<12x1xf32>
    %98 = vector.broadcast %2 : vector<1x256xf32> to vector<12x256xf32>
    %99 = vector.broadcast %12 : vector<12x1xf32> to vector<12x256xf32>
    %100 = arith.subf %98, %99 : vector<12x256xf32>
    %101 = vector.broadcast %97 : vector<12x1xf32> to vector<12x256xf32>
    %102 = arith.mulf %101, %100 : vector<12x256xf32>
    %103 = arith.addf %96, %102 : vector<12x256xf32>
    %104 = vector.broadcast %75 : vector<12x1xf32> to vector<12x256xf32>
    %105 = arith.mulf %103, %104 : vector<12x256xf32>
    %cst_11 = arith.constant 1.000000e+00 : f32
    %106 = vector.broadcast %cst_11 : f32 to vector<12x256xf32>
    %107 = arith.subf %106, %90 : vector<12x256xf32>
    %108 = arith.subf %107, %105 : vector<12x256xf32>
    %109 = vector.broadcast %7 : vector<12x1xf32> to vector<12x256xf32>
    %110 = arith.mulf %90, %109 : vector<12x256xf32>
    %111 = vector.broadcast %10 : vector<12x1xf32> to vector<12x256xf32>
    %112 = arith.mulf %105, %111 : vector<12x256xf32>
    %113 = arith.addf %110, %112 : vector<12x256xf32>
    %114 = vector.broadcast %13 : vector<12x1xf32> to vector<12x256xf32>
    %115 = arith.mulf %108, %114 : vector<12x256xf32>
    %116 = arith.addf %113, %115 : vector<12x256xf32>
    %cst_12 = arith.constant 0.000000e+00 : f32
    %117 = vector.broadcast %cst_12 : f32 to vector<12x256xf32>
    %118 = arith.cmpf oge, %90, %117 : vector<12x256xf32>
    %cst_13 = arith.constant 0.000000e+00 : f32
    %119 = vector.broadcast %cst_13 : f32 to vector<12x256xf32>
    %120 = arith.cmpf oge, %105, %119 : vector<12x256xf32>
    %121 = arith.andi %118, %120 : vector<12x256xi1>
    %cst_14 = arith.constant 0.000000e+00 : f32
    %122 = vector.broadcast %cst_14 : f32 to vector<12x256xf32>
    %123 = arith.cmpf oge, %108, %122 : vector<12x256xf32>
    %124 = arith.andi %121, %123 : vector<12x256xi1>
    %125 = vector.broadcast %69 : vector<12x1xi1> to vector<12x256xi1>
    %126 = arith.andi %124, %125 : vector<12x256xi1>
    %cst_15 = arith.constant 9.99999974E-5 : f32
    %127 = vector.broadcast %cst_15 : f32 to vector<12x256xf32>
    %128 = arith.cmpf ogt, %116, %127 : vector<12x256xf32>
    %129 = arith.andi %126, %128 : vector<12x256xi1>
    %130 = tpu.iota {dimensions = array<i32: 0>} : vector<12x256xi32>
    %131 = tpu.bitcast %116 : vector<12x256xf32> -> vector<12x256xi32>
    %c-16_i32 = arith.constant -16 : i32
    %132 = vector.broadcast %c-16_i32 : i32 to vector<12x256xi32>
    %133 = arith.andi %131, %132 : vector<12x256xi32>
    %134 = arith.ori %133, %130 : vector<12x256xi32>
    %c2139095040_i32 = arith.constant 2139095040 : i32
    %135 = vector.broadcast %c2139095040_i32 : i32 to vector<12x256xi32>
    %136 = arith.select %129, %134, %135 : vector<12x256xi1>, vector<12x256xi32>
    %cst_16 = arith.constant dense<2147483647> : vector<256xi32>
    %137 = vector.multi_reduction <minsi>, %136, %cst_16 [0] : vector<12x256xi32> to vector<256xi32>
    %138 = vector.shape_cast %137 : vector<256xi32> to vector<1x256xi32>
    %c2139095040_i32_17 = arith.constant 2139095040 : i32
    %139 = vector.broadcast %c2139095040_i32_17 : i32 to vector<1x256xi32>
    %140 = arith.cmpi slt, %138, %139 : vector<1x256xi32>
    %c15_i32 = arith.constant 15 : i32
    %141 = vector.broadcast %c15_i32 : i32 to vector<1x256xi32>
    %142 = arith.andi %138, %141 : vector<1x256xi32>
    %c-1_i32 = arith.constant -1 : i32
    %143 = vector.broadcast %c-1_i32 : i32 to vector<1x256xi32>
    %144 = arith.select %140, %142, %143 : vector<1x256xi1>, vector<1x256xi32>
    %c-16_i32_18 = arith.constant -16 : i32
    %145 = vector.broadcast %c-16_i32_18 : i32 to vector<1x256xi32>
    %146 = arith.andi %138, %145 : vector<1x256xi32>
    %147 = tpu.bitcast %146 : vector<1x256xi32> -> vector<1x256xf32>
    %148 = vector.broadcast %138 : vector<1x256xi32> to vector<12x256xi32>
    %149 = arith.cmpi eq, %136, %148 : vector<12x256xi32>
    %150 = arith.andi %129, %149 : vector<12x256xi1>
    %cst_19 = arith.constant 0.000000e+00 : f32
    %151 = vector.broadcast %cst_19 : f32 to vector<12x256xf32>
    %152 = arith.select %150, %90, %151 : vector<12x256xi1>, vector<12x256xf32>
    %cst_20 = arith.constant dense<0.000000e+00> : vector<256xf32>
    %153 = vector.multi_reduction <add>, %152, %cst_20 [0] : vector<12x256xf32> to vector<256xf32>
    %154 = vector.shape_cast %153 : vector<256xf32> to vector<1x256xf32>
    %cst_21 = arith.constant 0.000000e+00 : f32
    %155 = vector.broadcast %cst_21 : f32 to vector<12x256xf32>
    %156 = arith.select %150, %105, %155 : vector<12x256xi1>, vector<12x256xf32>
    %cst_22 = arith.constant dense<0.000000e+00> : vector<256xf32>
    %157 = vector.multi_reduction <add>, %156, %cst_22 [0] : vector<12x256xf32> to vector<256xf32>
    %158 = vector.shape_cast %157 : vector<256xf32> to vector<1x256xf32>
    %cst_23 = arith.constant 0.000000e+00 : f32
    %159 = vector.broadcast %cst_23 : f32 to vector<12x256xf32>
    %160 = arith.select %150, %108, %159 : vector<12x256xi1>, vector<12x256xf32>
    %cst_24 = arith.constant dense<0.000000e+00> : vector<256xf32>
    %161 = vector.multi_reduction <add>, %160, %cst_24 [0] : vector<12x256xf32> to vector<256xf32>
    %162 = vector.shape_cast %161 : vector<256xf32> to vector<1x256xf32>
    %163 = arith.extui %150 : vector<12x256xi1> to vector<12x256xi32>
    %164 = arith.sitofp %163 : vector<12x256xi32> to vector<12x256xf32>
    %cst_25 = arith.constant dense<0.000000e+00> : vector<9x256xf32>
    %165 = tpu.matmul %59, %164, %cst_25 {dimension_numbers = #tpu.dot_dimension_numbers<[0], [0], [1], [1], [0, 1, 1, 1], [], []>} : vector<12x9xf32>, vector<12x256xf32>, vector<9x256xf32> -> vector<9x256xf32>
    %166 = vector.extract_strided_slice %165 {offsets = [0, 0], sizes = [1, 256], strides = [1, 1]} : vector<9x256xf32> to vector<1x256xf32>
    %167 = arith.mulf %166, %154 : vector<1x256xf32>
    %168 = vector.extract_strided_slice %165 {offsets = [3, 0], sizes = [1, 256], strides = [1, 1]} : vector<9x256xf32> to vector<1x256xf32>
    %169 = arith.mulf %168, %158 : vector<1x256xf32>
    %170 = arith.addf %167, %169 : vector<1x256xf32>
    %171 = vector.extract_strided_slice %165 {offsets = [6, 0], sizes = [1, 256], strides = [1, 1]} : vector<9x256xf32> to vector<1x256xf32>
    %172 = arith.mulf %171, %162 : vector<1x256xf32>
    %173 = arith.addf %170, %172 : vector<1x256xf32>
    %cst_26 = arith.constant 1.000000e+00 : f32
    %174 = vector.broadcast %cst_26 : f32 to vector<1x256xf32>
    %175 = arith.select %140, %173, %174 : vector<1x256xi1>, vector<1x256xf32>
    %176 = vector.extract_strided_slice %165 {offsets = [1, 0], sizes = [1, 256], strides = [1, 1]} : vector<9x256xf32> to vector<1x256xf32>
    %177 = arith.mulf %176, %154 : vector<1x256xf32>
    %178 = vector.extract_strided_slice %165 {offsets = [4, 0], sizes = [1, 256], strides = [1, 1]} : vector<9x256xf32> to vector<1x256xf32>
    %179 = arith.mulf %178, %158 : vector<1x256xf32>
    %180 = arith.addf %177, %179 : vector<1x256xf32>
    %181 = vector.extract_strided_slice %165 {offsets = [7, 0], sizes = [1, 256], strides = [1, 1]} : vector<9x256xf32> to vector<1x256xf32>
    %182 = arith.mulf %181, %162 : vector<1x256xf32>
    %183 = arith.addf %180, %182 : vector<1x256xf32>
    %cst_27 = arith.constant 1.000000e+00 : f32
    %184 = vector.broadcast %cst_27 : f32 to vector<1x256xf32>
    %185 = arith.select %140, %183, %184 : vector<1x256xi1>, vector<1x256xf32>
    %186 = vector.extract_strided_slice %165 {offsets = [2, 0], sizes = [1, 256], strides = [1, 1]} : vector<9x256xf32> to vector<1x256xf32>
    %187 = arith.mulf %186, %154 : vector<1x256xf32>
    %188 = vector.extract_strided_slice %165 {offsets = [5, 0], sizes = [1, 256], strides = [1, 1]} : vector<9x256xf32> to vector<1x256xf32>
    %189 = arith.mulf %188, %158 : vector<1x256xf32>
    %190 = arith.addf %187, %189 : vector<1x256xf32>
    %191 = vector.extract_strided_slice %165 {offsets = [8, 0], sizes = [1, 256], strides = [1, 1]} : vector<9x256xf32> to vector<1x256xf32>
    %192 = arith.mulf %191, %162 : vector<1x256xf32>
    %193 = arith.addf %190, %192 : vector<1x256xf32>
    %cst_28 = arith.constant 1.000000e+00 : f32
    %194 = vector.broadcast %cst_28 : f32 to vector<1x256xf32>
    %195 = arith.select %140, %193, %194 : vector<1x256xi1>, vector<1x256xf32>
    %cst_29 = arith.constant -1.000000e+00 : f32
    %196 = vector.broadcast %cst_29 : f32 to vector<1x256xf32>
    %197 = arith.select %140, %147, %196 : vector<1x256xi1>, vector<1x256xf32>
    %cst_30 = arith.constant -1.000000e+00 : f32
    %198 = vector.broadcast %cst_30 : f32 to vector<1x256xf32>
    %199 = arith.select %140, %154, %198 : vector<1x256xi1>, vector<1x256xf32>
    %cst_31 = arith.constant -1.000000e+00 : f32
    %200 = vector.broadcast %cst_31 : f32 to vector<1x256xf32>
    %201 = arith.select %140, %158, %200 : vector<1x256xi1>, vector<1x256xf32>
    %cst_32 = arith.constant -1.000000e+00 : f32
    %202 = vector.broadcast %cst_32 : f32 to vector<1x256xf32>
    %203 = arith.select %140, %162, %202 : vector<1x256xi1>, vector<1x256xf32>
    %204 = tpu.bitcast %144 : vector<1x256xi32> -> vector<1x256xf32>
    %205 = tpu.concatenate %175, %185, %195, %197, %199, %201, %203, %204 in 0 : vector<1x256xf32>, vector<1x256xf32>, vector<1x256xf32>, vector<1x256xf32>, vector<1x256xf32>, vector<1x256xf32>, vector<1x256xf32>, vector<1x256xf32> -> vector<8x256xf32>
    %c0_33 = arith.constant 0 : index
    %c0_34 = arith.constant 0 : index
    %c0_35 = arith.constant 0 : index
    %206 = vector.load %arg3[%c0_33, %c0_34, %c0_35] : memref<2x8x256xf32, #tpu.memory_space<vmem>>, vector<1x8x256xf32>
    %207 = vector.shape_cast %206 : vector<1x8x256xf32> to vector<8x256xf32>
    %208 = vector.shape_cast %205 : vector<8x256xf32> to vector<1x8x256xf32>
    tpu.vector_store %arg3[%c0_33, %c0_34, %c0_35], %208 {strides = array<i32>} : memref<2x8x256xf32, #tpu.memory_space<vmem>>, vector<1x8x256xf32>,
    %c1 = arith.constant 1 : index
    %c0_36 = arith.constant 0 : index
    %c0_37 = arith.constant 0 : index
    %209 = vector.load %arg2[%c1, %c0_36, %c0_37] : memref<2x12x27xf32, #tpu.memory_space<vmem>>, vector<1x12x27xf32>
    %210 = vector.shape_cast %209 : vector<1x12x27xf32> to vector<12x27xf32>
    %211 = vector.extract_strided_slice %210 {offsets = [0, 0], sizes = [12, 1], strides = [1, 1]} : vector<12x27xf32> to vector<12x1xf32>
    %212 = vector.extract_strided_slice %210 {offsets = [0, 1], sizes = [12, 1], strides = [1, 1]} : vector<12x27xf32> to vector<12x1xf32>
    %213 = vector.extract_strided_slice %210 {offsets = [0, 2], sizes = [12, 1], strides = [1, 1]} : vector<12x27xf32> to vector<12x1xf32>
    %214 = vector.extract_strided_slice %210 {offsets = [0, 3], sizes = [12, 1], strides = [1, 1]} : vector<12x27xf32> to vector<12x1xf32>
    %215 = vector.extract_strided_slice %210 {offsets = [0, 4], sizes = [12, 1], strides = [1, 1]} : vector<12x27xf32> to vector<12x1xf32>
    %216 = vector.extract_strided_slice %210 {offsets = [0, 5], sizes = [12, 1], strides = [1, 1]} : vector<12x27xf32> to vector<12x1xf32>
    %217 = vector.extract_strided_slice %210 {offsets = [0, 6], sizes = [12, 1], strides = [1, 1]} : vector<12x27xf32> to vector<12x1xf32>
    %218 = vector.extract_strided_slice %210 {offsets = [0, 7], sizes = [12, 1], strides = [1, 1]} : vector<12x27xf32> to vector<12x1xf32>
    %219 = vector.extract_strided_slice %210 {offsets = [0, 8], sizes = [12, 1], strides = [1, 1]} : vector<12x27xf32> to vector<12x1xf32>
    %220 = vector.extract_strided_slice %210 {offsets = [0, 9], sizes = [12, 9], strides = [1, 1]} : vector<12x27xf32> to vector<12x9xf32>
    %221 = vector.extract_strided_slice %220 {offsets = [0, 3], sizes = [12, 1], strides = [1, 1]} : vector<12x9xf32> to vector<12x1xf32>
    %222 = vector.extract_strided_slice %220 {offsets = [0, 0], sizes = [12, 1], strides = [1, 1]} : vector<12x9xf32> to vector<12x1xf32>
    %223 = arith.subf %221, %222 : vector<12x1xf32>
    %224 = vector.extract_strided_slice %220 {offsets = [0, 4], sizes = [12, 1], strides = [1, 1]} : vector<12x9xf32> to vector<12x1xf32>
    %225 = vector.extract_strided_slice %220 {offsets = [0, 1], sizes = [12, 1], strides = [1, 1]} : vector<12x9xf32> to vector<12x1xf32>
    %226 = arith.subf %224, %225 : vector<12x1xf32>
    %227 = vector.extract_strided_slice %220 {offsets = [0, 5], sizes = [12, 1], strides = [1, 1]} : vector<12x9xf32> to vector<12x1xf32>
    %228 = vector.extract_strided_slice %220 {offsets = [0, 2], sizes = [12, 1], strides = [1, 1]} : vector<12x9xf32> to vector<12x1xf32>
    %229 = arith.subf %227, %228 : vector<12x1xf32>
    %230 = vector.extract_strided_slice %220 {offsets = [0, 6], sizes = [12, 1], strides = [1, 1]} : vector<12x9xf32> to vector<12x1xf32>
    %231 = vector.extract_strided_slice %220 {offsets = [0, 0], sizes = [12, 1], strides = [1, 1]} : vector<12x9xf32> to vector<12x1xf32>
    %232 = arith.subf %230, %231 : vector<12x1xf32>
    %233 = vector.extract_strided_slice %220 {offsets = [0, 7], sizes = [12, 1], strides = [1, 1]} : vector<12x9xf32> to vector<12x1xf32>
    %234 = vector.extract_strided_slice %220 {offsets = [0, 1], sizes = [12, 1], strides = [1, 1]} : vector<12x9xf32> to vector<12x1xf32>
    %235 = arith.subf %233, %234 : vector<12x1xf32>
    %236 = vector.extract_strided_slice %220 {offsets = [0, 8], sizes = [12, 1], strides = [1, 1]} : vector<12x9xf32> to vector<12x1xf32>
    %237 = vector.extract_strided_slice %220 {offsets = [0, 2], sizes = [12, 1], strides = [1, 1]} : vector<12x9xf32> to vector<12x1xf32>
    %238 = arith.subf %236, %237 : vector<12x1xf32>
    %239 = arith.mulf %226, %238 : vector<12x1xf32>
    %240 = arith.mulf %229, %235 : vector<12x1xf32>
    %241 = arith.subf %239, %240 : vector<12x1xf32>
    %242 = arith.mulf %229, %232 : vector<12x1xf32>
    %243 = arith.mulf %223, %238 : vector<12x1xf32>
    %244 = arith.subf %242, %243 : vector<12x1xf32>
    %245 = arith.mulf %223, %235 : vector<12x1xf32>
    %246 = arith.mulf %226, %232 : vector<12x1xf32>
    %247 = arith.subf %245, %246 : vector<12x1xf32>
    %248 = arith.mulf %241, %241 : vector<12x1xf32>
    %249 = arith.mulf %244, %244 : vector<12x1xf32>
    %250 = arith.addf %248, %249 : vector<12x1xf32>
    %251 = arith.mulf %247, %247 : vector<12x1xf32>
    %252 = arith.addf %250, %251 : vector<12x1xf32>
    %cst_38 = arith.constant 9.99999996E-13 : f32
    %253 = vector.broadcast %cst_38 : f32 to vector<12x1xf32>
    %254 = arith.addf %252, %253 : vector<12x1xf32>
    %255 = math.rsqrt %254 : vector<12x1xf32>
    %256 = arith.mulf %247, %255 : vector<12x1xf32>
    %cst_39 = arith.constant 0.000000e+00 : f32
    %257 = vector.broadcast %cst_39 : f32 to vector<12x1xf32>
    %258 = arith.maximumf %256, %257 : vector<12x1xf32>
    %cst_40 = arith.constant 0.699999988 : f32
    %259 = vector.broadcast %cst_40 : f32 to vector<12x1xf32>
    %260 = arith.mulf %259, %258 : vector<12x1xf32>
    %cst_41 = arith.constant 3.000000e-01 : f32
    %261 = vector.broadcast %cst_41 : f32 to vector<12x1xf32>
    %262 = arith.addf %261, %260 : vector<12x1xf32>
    %263 = vector.extract_strided_slice %210 {offsets = [0, 18], sizes = [12, 9], strides = [1, 1]} : vector<12x27xf32> to vector<12x9xf32>
    %264 = vector.broadcast %262 : vector<12x1xf32> to vector<12x9xf32>
    %265 = arith.mulf %263, %264 : vector<12x9xf32>
    %266 = arith.subf %215, %218 : vector<12x1xf32>
    %267 = arith.subf %211, %217 : vector<12x1xf32>
    %268 = arith.mulf %266, %267 : vector<12x1xf32>
    %269 = arith.subf %217, %214 : vector<12x1xf32>
    %270 = arith.subf %212, %218 : vector<12x1xf32>
    %271 = arith.mulf %269, %270 : vector<12x1xf32>
    %272 = arith.addf %268, %271 : vector<12x1xf32>
    %273 = math.absf %272 : vector<12x1xf32>
    %cst_42 = arith.constant 9.99999993E-9 : f32
    %274 = vector.broadcast %cst_42 : f32 to vector<12x1xf32>
    %275 = arith.cmpf ogt, %273, %274 : vector<12x1xf32>
    %cst_43 = arith.constant 1.000000e+00 : f32
    %276 = vector.broadcast %cst_43 : f32 to vector<12x1xf32>
    %277 = arith.select %275, %272, %276 : vector<12x1xi1>, vector<12x1xf32>
    %cst_44 = arith.constant 1.000000e+00 : f32
    %278 = vector.broadcast %cst_44 : f32 to vector<12x1xf32>
    %279 = arith.divf %278, %277 : vector<12x1xf32>
    %cst_45 = arith.constant 0.000000e+00 : f32
    %280 = vector.broadcast %cst_45 : f32 to vector<12x1xf32>
    %281 = arith.select %275, %279, %280 : vector<12x1xi1>, vector<12x1xf32>
    %282 = arith.subf %215, %218 : vector<12x1xf32>
    %283 = vector.broadcast %1 : vector<1x256xf32> to vector<12x256xf32>
    %284 = vector.broadcast %217 : vector<12x1xf32> to vector<12x256xf32>
    %285 = arith.subf %283, %284 : vector<12x256xf32>
    %286 = vector.broadcast %282 : vector<12x1xf32> to vector<12x256xf32>
    %287 = arith.mulf %286, %285 : vector<12x256xf32>
    %288 = arith.subf %217, %214 : vector<12x1xf32>
    %289 = vector.broadcast %2 : vector<1x256xf32> to vector<12x256xf32>
    %290 = vector.broadcast %218 : vector<12x1xf32> to vector<12x256xf32>
    %291 = arith.subf %289, %290 : vector<12x256xf32>
    %292 = vector.broadcast %288 : vector<12x1xf32> to vector<12x256xf32>
    %293 = arith.mulf %292, %291 : vector<12x256xf32>
    %294 = arith.addf %287, %293 : vector<12x256xf32>
    %295 = vector.broadcast %281 : vector<12x1xf32> to vector<12x256xf32>
    %296 = arith.mulf %294, %295 : vector<12x256xf32>
    %297 = arith.subf %218, %212 : vector<12x1xf32>
    %298 = vector.broadcast %1 : vector<1x256xf32> to vector<12x256xf32>
    %299 = vector.broadcast %217 : vector<12x1xf32> to vector<12x256xf32>
    %300 = arith.subf %298, %299 : vector<12x256xf32>
    %301 = vector.broadcast %297 : vector<12x1xf32> to vector<12x256xf32>
    %302 = arith.mulf %301, %300 : vector<12x256xf32>
    %303 = arith.subf %211, %217 : vector<12x1xf32>
    %304 = vector.broadcast %2 : vector<1x256xf32> to vector<12x256xf32>
    %305 = vector.broadcast %218 : vector<12x1xf32> to vector<12x256xf32>
    %306 = arith.subf %304, %305 : vector<12x256xf32>
    %307 = vector.broadcast %303 : vector<12x1xf32> to vector<12x256xf32>
    %308 = arith.mulf %307, %306 : vector<12x256xf32>
    %309 = arith.addf %302, %308 : vector<12x256xf32>
    %310 = vector.broadcast %281 : vector<12x1xf32> to vector<12x256xf32>
    %311 = arith.mulf %309, %310 : vector<12x256xf32>
    %cst_46 = arith.constant 1.000000e+00 : f32
    %312 = vector.broadcast %cst_46 : f32 to vector<12x256xf32>
    %313 = arith.subf %312, %296 : vector<12x256xf32>
    %314 = arith.subf %313, %311 : vector<12x256xf32>
    %315 = vector.broadcast %213 : vector<12x1xf32> to vector<12x256xf32>
    %316 = arith.mulf %296, %315 : vector<12x256xf32>
    %317 = vector.broadcast %216 : vector<12x1xf32> to vector<12x256xf32>
    %318 = arith.mulf %311, %317 : vector<12x256xf32>
    %319 = arith.addf %316, %318 : vector<12x256xf32>
    %320 = vector.broadcast %219 : vector<12x1xf32> to vector<12x256xf32>
    %321 = arith.mulf %314, %320 : vector<12x256xf32>
    %322 = arith.addf %319, %321 : vector<12x256xf32>
    %cst_47 = arith.constant 0.000000e+00 : f32
    %323 = vector.broadcast %cst_47 : f32 to vector<12x256xf32>
    %324 = arith.cmpf oge, %296, %323 : vector<12x256xf32>
    %cst_48 = arith.constant 0.000000e+00 : f32
    %325 = vector.broadcast %cst_48 : f32 to vector<12x256xf32>
    %326 = arith.cmpf oge, %311, %325 : vector<12x256xf32>
    %327 = arith.andi %324, %326 : vector<12x256xi1>
    %cst_49 = arith.constant 0.000000e+00 : f32
    %328 = vector.broadcast %cst_49 : f32 to vector<12x256xf32>
    %329 = arith.cmpf oge, %314, %328 : vector<12x256xf32>
    %330 = arith.andi %327, %329 : vector<12x256xi1>
    %331 = vector.broadcast %275 : vector<12x1xi1> to vector<12x256xi1>
    %332 = arith.andi %330, %331 : vector<12x256xi1>
    %cst_50 = arith.constant 9.99999974E-5 : f32
    %333 = vector.broadcast %cst_50 : f32 to vector<12x256xf32>
    %334 = arith.cmpf ogt, %322, %333 : vector<12x256xf32>
    %335 = arith.andi %332, %334 : vector<12x256xi1>
    %336 = tpu.iota {dimensions = array<i32: 0>} : vector<12x256xi32>
    %337 = tpu.bitcast %322 : vector<12x256xf32> -> vector<12x256xi32>
    %c-16_i32_51 = arith.constant -16 : i32
    %338 = vector.broadcast %c-16_i32_51 : i32 to vector<12x256xi32>
    %339 = arith.andi %337, %338 : vector<12x256xi32>
    %340 = arith.ori %339, %336 : vector<12x256xi32>
    %c2139095040_i32_52 = arith.constant 2139095040 : i32
    %341 = vector.broadcast %c2139095040_i32_52 : i32 to vector<12x256xi32>
    %342 = arith.select %335, %340, %341 : vector<12x256xi1>, vector<12x256xi32>
    %cst_53 = arith.constant dense<2147483647> : vector<256xi32>
    %343 = vector.multi_reduction <minsi>, %342, %cst_53 [0] : vector<12x256xi32> to vector<256xi32>
    %344 = vector.shape_cast %343 : vector<256xi32> to vector<1x256xi32>
    %c2139095040_i32_54 = arith.constant 2139095040 : i32
    %345 = vector.broadcast %c2139095040_i32_54 : i32 to vector<1x256xi32>
    %346 = arith.cmpi slt, %344, %345 : vector<1x256xi32>
    %c15_i32_55 = arith.constant 15 : i32
    %347 = vector.broadcast %c15_i32_55 : i32 to vector<1x256xi32>
    %348 = arith.andi %344, %347 : vector<1x256xi32>
    %c-1_i32_56 = arith.constant -1 : i32
    %349 = vector.broadcast %c-1_i32_56 : i32 to vector<1x256xi32>
    %350 = arith.select %346, %348, %349 : vector<1x256xi1>, vector<1x256xi32>
    %c-16_i32_57 = arith.constant -16 : i32
    %351 = vector.broadcast %c-16_i32_57 : i32 to vector<1x256xi32>
    %352 = arith.andi %344, %351 : vector<1x256xi32>
    %353 = tpu.bitcast %352 : vector<1x256xi32> -> vector<1x256xf32>
    %354 = vector.broadcast %344 : vector<1x256xi32> to vector<12x256xi32>
    %355 = arith.cmpi eq, %342, %354 : vector<12x256xi32>
    %356 = arith.andi %335, %355 : vector<12x256xi1>
    %cst_58 = arith.constant 0.000000e+00 : f32
    %357 = vector.broadcast %cst_58 : f32 to vector<12x256xf32>
    %358 = arith.select %356, %296, %357 : vector<12x256xi1>, vector<12x256xf32>
    %cst_59 = arith.constant dense<0.000000e+00> : vector<256xf32>
    %359 = vector.multi_reduction <add>, %358, %cst_59 [0] : vector<12x256xf32> to vector<256xf32>
    %360 = vector.shape_cast %359 : vector<256xf32> to vector<1x256xf32>
    %cst_60 = arith.constant 0.000000e+00 : f32
    %361 = vector.broadcast %cst_60 : f32 to vector<12x256xf32>
    %362 = arith.select %356, %311, %361 : vector<12x256xi1>, vector<12x256xf32>
    %cst_61 = arith.constant dense<0.000000e+00> : vector<256xf32>
    %363 = vector.multi_reduction <add>, %362, %cst_61 [0] : vector<12x256xf32> to vector<256xf32>
    %364 = vector.shape_cast %363 : vector<256xf32> to vector<1x256xf32>
    %cst_62 = arith.constant 0.000000e+00 : f32
    %365 = vector.broadcast %cst_62 : f32 to vector<12x256xf32>
    %366 = arith.select %356, %314, %365 : vector<12x256xi1>, vector<12x256xf32>
    %cst_63 = arith.constant dense<0.000000e+00> : vector<256xf32>
    %367 = vector.multi_reduction <add>, %366, %cst_63 [0] : vector<12x256xf32> to vector<256xf32>
    %368 = vector.shape_cast %367 : vector<256xf32> to vector<1x256xf32>
    %369 = arith.extui %356 : vector<12x256xi1> to vector<12x256xi32>
    %370 = arith.sitofp %369 : vector<12x256xi32> to vector<12x256xf32>
    %cst_64 = arith.constant dense<0.000000e+00> : vector<9x256xf32>
    %371 = tpu.matmul %265, %370, %cst_64 {dimension_numbers = #tpu.dot_dimension_numbers<[0], [0], [1], [1], [0, 1, 1, 1], [], []>} : vector<12x9xf32>, vector<12x256xf32>, vector<9x256xf32> -> vector<9x256xf32>
    %372 = vector.extract_strided_slice %371 {offsets = [0, 0], sizes = [1, 256], strides = [1, 1]} : vector<9x256xf32> to vector<1x256xf32>
    %373 = arith.mulf %372, %360 : vector<1x256xf32>
    %374 = vector.extract_strided_slice %371 {offsets = [3, 0], sizes = [1, 256], strides = [1, 1]} : vector<9x256xf32> to vector<1x256xf32>
    %375 = arith.mulf %374, %364 : vector<1x256xf32>
    %376 = arith.addf %373, %375 : vector<1x256xf32>
    %377 = vector.extract_strided_slice %371 {offsets = [6, 0], sizes = [1, 256], strides = [1, 1]} : vector<9x256xf32> to vector<1x256xf32>
    %378 = arith.mulf %377, %368 : vector<1x256xf32>
    %379 = arith.addf %376, %378 : vector<1x256xf32>
    %cst_65 = arith.constant 1.000000e+00 : f32
    %380 = vector.broadcast %cst_65 : f32 to vector<1x256xf32>
    %381 = arith.select %346, %379, %380 : vector<1x256xi1>, vector<1x256xf32>
    %382 = vector.extract_strided_slice %371 {offsets = [1, 0], sizes = [1, 256], strides = [1, 1]} : vector<9x256xf32> to vector<1x256xf32>
    %383 = arith.mulf %382, %360 : vector<1x256xf32>
    %384 = vector.extract_strided_slice %371 {offsets = [4, 0], sizes = [1, 256], strides = [1, 1]} : vector<9x256xf32> to vector<1x256xf32>
    %385 = arith.mulf %384, %364 : vector<1x256xf32>
    %386 = arith.addf %383, %385 : vector<1x256xf32>
    %387 = vector.extract_strided_slice %371 {offsets = [7, 0], sizes = [1, 256], strides = [1, 1]} : vector<9x256xf32> to vector<1x256xf32>
    %388 = arith.mulf %387, %368 : vector<1x256xf32>
    %389 = arith.addf %386, %388 : vector<1x256xf32>
    %cst_66 = arith.constant 1.000000e+00 : f32
    %390 = vector.broadcast %cst_66 : f32 to vector<1x256xf32>
    %391 = arith.select %346, %389, %390 : vector<1x256xi1>, vector<1x256xf32>
    %392 = vector.extract_strided_slice %371 {offsets = [2, 0], sizes = [1, 256], strides = [1, 1]} : vector<9x256xf32> to vector<1x256xf32>
    %393 = arith.mulf %392, %360 : vector<1x256xf32>
    %394 = vector.extract_strided_slice %371 {offsets = [5, 0], sizes = [1, 256], strides = [1, 1]} : vector<9x256xf32> to vector<1x256xf32>
    %395 = arith.mulf %394, %364 : vector<1x256xf32>
    %396 = arith.addf %393, %395 : vector<1x256xf32>
    %397 = vector.extract_strided_slice %371 {offsets = [8, 0], sizes = [1, 256], strides = [1, 1]} : vector<9x256xf32> to vector<1x256xf32>
    %398 = arith.mulf %397, %368 : vector<1x256xf32>
    %399 = arith.addf %396, %398 : vector<1x256xf32>
    %cst_67 = arith.constant 1.000000e+00 : f32
    %400 = vector.broadcast %cst_67 : f32 to vector<1x256xf32>
    %401 = arith.select %346, %399, %400 : vector<1x256xi1>, vector<1x256xf32>
    %cst_68 = arith.constant -1.000000e+00 : f32
    %402 = vector.broadcast %cst_68 : f32 to vector<1x256xf32>
    %403 = arith.select %346, %353, %402 : vector<1x256xi1>, vector<1x256xf32>
    %cst_69 = arith.constant -1.000000e+00 : f32
    %404 = vector.broadcast %cst_69 : f32 to vector<1x256xf32>
    %405 = arith.select %346, %360, %404 : vector<1x256xi1>, vector<1x256xf32>
    %cst_70 = arith.constant -1.000000e+00 : f32
    %406 = vector.broadcast %cst_70 : f32 to vector<1x256xf32>
    %407 = arith.select %346, %364, %406 : vector<1x256xi1>, vector<1x256xf32>
    %cst_71 = arith.constant -1.000000e+00 : f32
    %408 = vector.broadcast %cst_71 : f32 to vector<1x256xf32>
    %409 = arith.select %346, %368, %408 : vector<1x256xi1>, vector<1x256xf32>
    %410 = tpu.bitcast %350 : vector<1x256xi32> -> vector<1x256xf32>
    %411 = tpu.concatenate %381, %391, %401, %403, %405, %407, %409, %410 in 0 : vector<1x256xf32>, vector<1x256xf32>, vector<1x256xf32>, vector<1x256xf32>, vector<1x256xf32>, vector<1x256xf32>, vector<1x256xf32>, vector<1x256xf32> -> vector<8x256xf32>
    %c1_72 = arith.constant 1 : index
    %c0_73 = arith.constant 0 : index
    %c0_74 = arith.constant 0 : index
    %412 = vector.load %arg3[%c1_72, %c0_73, %c0_74] : memref<2x8x256xf32, #tpu.memory_space<vmem>>, vector<1x8x256xf32>
    %413 = vector.shape_cast %412 : vector<1x8x256xf32> to vector<8x256xf32>
    %414 = vector.shape_cast %411 : vector<8x256xf32> to vector<1x8x256xf32>
    tpu.vector_store %arg3[%c1_72, %c0_73, %c0_74], %414 {strides = array<i32>} : memref<2x8x256xf32, #tpu.memory_space<vmem>>, vector<1x8x256xf32>,
    return
  }
  func.func @transform_0(%arg0: i32) -> (i32, i32) {
    %c0_i32 = arith.constant 0 : i32
    %c0_i32_0 = arith.constant 0 : i32
    %c0_i32_1 = arith.constant 0 : i32
    return %c0_i32, %c0_i32_0 : i32, i32
  }
  func.func @transform_1(%arg0: i32) -> (i32, i32, i32) {
    %c0_i32 = arith.constant 0 : i32
    %c0_i32_0 = arith.constant 0 : i32
    %c0_i32_1 = arith.constant 0 : i32
    return %arg0, %c0_i32, %c0_i32_0 : i32, i32, i32
  }
  func.func @transform_2(%arg0: i32) -> (i32, i32, i32) {
    %c0_i32 = arith.constant 0 : i32
    %c0_i32_0 = arith.constant 0 : i32
    %c0_i32_1 = arith.constant 0 : i32
    return %arg0, %c0_i32, %c0_i32_0 : i32, i32, i32
  }
}

</mosaic_0001>

<llo_original>
// kernel: squeeze.3
$region0: #{squeeze.3}
  %s0 = inlined_call_operand.vmem [shape: f32[2,256], index: 0, kind: input, shape index: {}]
  %s1 = inlined_call_operand.hbm [shape: f32[2,16,16,1], index: 1, kind: output, shape index: {}]
  $region1: #{squeeze.3} parent=0
    #allocation0 [shape = 'u8[16384]{0}', space=vmem, size = 0x4000, scoped, tag = 'operand span for operand 1']
    #allocation1 [shape = 's32[1]{0}', space=sflag, size = 0x4, scoped, tag = 'scoped memory for squeeze.3']
    #allocation2 [shape = 'u8[8192]{0}', space=vmem, size = 0x2000, scoped, tag = 'scoped mem for input reshape']
    %2 = vsyncpa [#allocation1], 0
    %s4 = sshll.u32 1, 2
    %s5 = ssub.s32 %s4, 1
    %s6 = scalar_lea.vmem %s0, 2
    %v7 = vld [vmem:[%s6] sm:%s5]
    %s8 = scalar_lea.vmem [#allocation2], 8
    %9 = vst [vmem:[%s8] sm:%s5] %v7
    %v10 = vld [vmem:[%s0] sm:%s5]
    %11 = vst [vmem:[#allocation2] sm:%s5] %v10
    %v12 = vld [vmem:[#allocation2] sm:$0x3]
    %vm13 = vcmask 130048
    %14 = vst.msk [vmem:[#allocation0] ss:$16 sm:$0x3] %vm13, %v12
    %s15 = scalar_lea.vmem [#allocation2], 8
    %v16 = vld [vmem:[%s15] sm:$0x3]
    %vm17 = vcmask 130048
    %s18 = scalar_lea.vmem [#allocation0], 8
    %19 = vst.msk [vmem:[%s18] ss:$16 sm:$0x3] %vm17, %v16
    %v20 = vld.sshfl [vmem:[#allocation2] sm:$0xff pattern:$0x99999180]
    %21 = vrot.lane.b32.xlu0 %v20, 112
    %v22 = vpop.permute.xlu0 %21
    %vm23 = vcmask 130048
    %s24 = scalar_lea.vmem [#allocation0], 1
    %25 = vst.msk [vmem:[%s24] ss:$8 sm:$0xf] %vm23, %v22
    %v26 = vld.sshfl [vmem:[#allocation2] sm:$0xff pattern:$0x99999180]
    %27 = vrot.lane.b32.xlu0 %v26, 96
    %v28 = vpop.permute.xlu0 %27
    %vm29 = vcmask 130048
    %s30 = scalar_lea.vmem [#allocation0], 2
    %31 = vst.msk [vmem:[%s30] ss:$8 sm:$0xf] %vm29, %v28
    %v32 = vld.sshfl [vmem:[#allocation2] sm:$0xff pattern:$0x99999180]
    %33 = vrot.lane.b32.xlu0 %v32, 80
    %v34 = vpop.permute.xlu0 %33
    %vm35 = vcmask 130048
    %s36 = scalar_lea.vmem [#allocation0], 3
    %37 = vst.msk [vmem:[%s36] ss:$8 sm:$0xf] %vm35, %v34
    %v38 = vld.sshfl [vmem:[#allocation2] sm:$0xff pattern:$0x99999180]
    %39 = vrot.lane.b32.xlu0 %v38, 64
    %v40 = vpop.permute.xlu0 %39
    %vm41 = vcmask 130048
    %s42 = scalar_lea.vmem [#allocation0], 4
    %43 = vst.msk [vmem:[%s42] ss:$8 sm:$0xf] %vm41, %v40
    %v44 = vld.sshfl [vmem:[#allocation2] sm:$0xff pattern:$0x99999180]
    %45 = vrot.lane.b32.xlu0 %v44, 48
    %v46 = vpop.permute.xlu0 %45
    %vm47 = vcmask 130048
    %s48 = scalar_lea.vmem [#allocation0], 5
    %49 = vst.msk [vmem:[%s48] ss:$8 sm:$0xf] %vm47, %v46
    %v50 = vld.sshfl [vmem:[#allocation2] sm:$0xff pattern:$0x99999180]
    %51 = vrot.lane.b32.xlu0 %v50, 32
    %v52 = vpop.permute.xlu0 %51
    %vm53 = vcmask 130048
    %s54 = scalar_lea.vmem [#allocation0], 6
    %55 = vst.msk [vmem:[%s54] ss:$8 sm:$0xf] %vm53, %v52
    %v56 = vld.sshfl [vmem:[#allocation2] sm:$0xff pattern:$0x99999180]
    %57 = vrot.lane.b32.xlu0 %v56, 16
    %v58 = vpop.permute.xlu0 %57
    %vm59 = vcmask 130048
    %s60 = scalar_lea.vmem [#allocation0], 7
    %61 = vst.msk [vmem:[%s60] ss:$8 sm:$0xf] %vm59, %v58
    %s63 = ssub.s32 512, 512
    %64 = vsyncadd [#allocation1], %s63
    %s66 = sshll.u32 [#allocation0], 4
    %s67 = int_to_ptr.vmem [resolvable:$true] %s66
    %69 = dma.vmem_to_hbm [thread:$0]  %s67, 512, %s1, [#allocation1]
    %70 = dma.done [#allocation1], 512
    %71 = vsyncpa [#allocation1], 1

// kernel: mesh_renderer_with_fragments.1
$region0: #{mesh_renderer_with_fragments.1}
  #allocation0 [shape = 'u32[]', space=smem, size = 0x4, offset = 0x4, fixed_abs, tag = 'smem constant byte address 0x4 - core index']
  #allocation1 [shape = 'u32[144,128]{1,0:T(1,128)}', space=vmem, size = 0x12000, scoped, tag = 'internal scratch']
  %s0 = inlined_call_operand.vmem [shape: f32[2,256], index: 0, kind: input, shape index: {}]
  %s1 = inlined_call_operand.vmem [shape: f32[2,12,27], index: 1, kind: input, shape index: {}]
  %s2 = inlined_call_operand.vmem [shape: f32[2,8,256], index: 2, kind: output, shape index: {}]
  %s3 = sld [smem:[#allocation0]]
  $region18: #{mesh_renderer_with_fragments.1} parent=0
    _
  %s5 = ssub.s32 1, %s3
  %s6 = scalar_select 0, %s5, %s3
  // Predicated region
  $region2: #{mesh_renderer_with_fragments.1} parent=0 // pred_check
    _
  $region3: #{mesh_renderer_with_fragments.1} parent=0 // pred_check_branch
    %8 = sbr.rel (0) target = $region5
  $region4: #{mesh_renderer_with_fragments.1} parent=0 // pred_region
    _
  $region5: #{mesh_renderer_with_fragments.1} parent=0 // pred_fallthru
    _
  // Predicated region
  $region6: #{mesh_renderer_with_fragments.1} parent=0 // pred_check
    _
  $region7: #{mesh_renderer_with_fragments.1} parent=0 // pred_check_branch
    %10 = sbr.rel (0) target = $region9
  $region8: #{mesh_renderer_with_fragments.1} parent=0 // pred_region
    _
  $region9: #{mesh_renderer_with_fragments.1} parent=0 // pred_fallthru
    _
  %v11 = vld [vmem:[%s0] sm:$0xf]
  %v12 = vld [vmem:[%s1] sm:$0xff]
  %v13 = vld [vmem:[%s1 + $0x8] sm:$0xf]
  %16 = vrot.lane.b32.xlu0 %v12, 3
  %v17 = vpop.permute.xlu0 %16
  %18 = vrot.lane.b32.xlu0 %v13, 3
  %v19 = vpop.permute.xlu0 %18
  %v22 = vsub.f32 %v12, %v17
  %v23 = vsub.f32 %v13, %v19
  %24 = vrot.lane.b32.xlu0 %v12, 6
  %v25 = vpop.permute.xlu0 %24
  %26 = vrot.lane.b32.xlu0 %v13, 6
  %v27 = vpop.permute.xlu0 %26
  %v30 = vsub.f32 %v12, %v25
  %v31 = vsub.f32 %v13, %v27
  %34 = vrot.lane.b32.xlu0 %v30, 124
  %v35 = vpop.permute.xlu0 %34
  %36 = vrot.lane.b32.xlu0 %v31, 124
  %v37 = vpop.permute.xlu0 %36
  %v40 = vmul.f32 %v22, %v35
  %v41 = vmul.f32 %v23, %v37
  %42 = vrot.lane.b32.xlu0 %v30, 126
  %v43 = vpop.permute.xlu0 %42
  %44 = vrot.lane.b32.xlu0 %v31, 126
  %v45 = vpop.permute.xlu0 %44
  %v48 = vmul.f32 %v22, %v43
  %v49 = vmul.f32 %v23, %v45
  %52 = vrot.lane.b32.xlu0 %v48, 127
  %v53 = vpop.permute.xlu0 %52
  %54 = vrot.lane.b32.xlu0 %v49, 127
  %v55 = vpop.permute.xlu0 %54
  %v58 = vsub.f32 %v40, %v53
  %v59 = vsub.f32 %v41, %v55
  %60 = vrot.lane.b32.xlu0 %v30, 127
  %v61 = vpop.permute.xlu0 %60
  %62 = vrot.lane.b32.xlu0 %v31, 127
  %v63 = vpop.permute.xlu0 %62
  %v66 = vmul.f32 %v22, %v61
  %v67 = vmul.f32 %v23, %v63
  %68 = vrot.lane.b32.xlu0 %v30, 123
  %v69 = vpop.permute.xlu0 %68
  %70 = vrot.lane.b32.xlu0 %v31, 123
  %v71 = vpop.permute.xlu0 %70
  %v74 = vmul.f32 %v22, %v69
  %v75 = vmul.f32 %v23, %v71
  %78 = vrot.lane.b32.xlu0 %v74, 2
  %v79 = vpop.permute.xlu0 %78
  %80 = vrot.lane.b32.xlu0 %v75, 2
  %v81 = vpop.permute.xlu0 %80
  %v84 = vsub.f32 %v66, %v79
  %v85 = vsub.f32 %v67, %v81
  %v86 = vmul.f32 %v58, %v58
  %v87 = vmul.f32 %v59, %v59
  %v88 = vmul.f32 %v84, %v84
  %v89 = vmul.f32 %v85, %v85
  %92 = vrot.lane.b32.xlu0 %v88, 127
  %v93 = vpop.permute.xlu0 %92
  %94 = vrot.lane.b32.xlu0 %v89, 127
  %v95 = vpop.permute.xlu0 %94
  %v98 = vadd.f32 %v86, %v93
  %v99 = vadd.f32 %v87, %v95
  %102 = vrot.lane.b32.xlu0 %v86, 1
  %v103 = vpop.permute.xlu0 %102
  %104 = vrot.lane.b32.xlu0 %v87, 1
  %v105 = vpop.permute.xlu0 %104
  %v108 = vadd.f32 %v98, %v103
  %v109 = vadd.f32 %v99, %v105
  %v110 = vadd.f32 %v108, 1e-12
  %v111 = vadd.f32 %v109, 1e-12
  %v112 = vrsqrt.pop %v110
  %v113 = vrsqrt.pop %v111
  %116 = vrot.lane.b32.xlu0 %v112, 127
  %v117 = vpop.permute.xlu0 %116
  %118 = vrot.lane.b32.xlu0 %v113, 127
  %v119 = vpop.permute.xlu0 %118
  %v122 = vmul.f32 %v58, %v117
  %v123 = vmul.f32 %v59, %v119
  %v124 = vmax.f32 %v122, 0.0
  %v125 = vmax.f32 %v123, 0.0
  %v126 = vmul.f32 %v124, 0.7
  %v127 = vmul.f32 %v125, 0.7
  %v128 = vadd.f32 %v126, 0.3
  %v129 = vadd.f32 %v127, 0.3
  %131 = vset.pattern.permute.xlu0 12
  %132 = vperm.xlu0 %131, %v128
  %v133 = vpop.permute.xlu0 %132
  %136 = vset.pattern.permute.xlu0 12
  %137 = vperm.xlu0 %136, %v129
  %v138 = vpop.permute.xlu0 %137
  %v140 = vmul.f32 %v12, %v133
  %v141 = vmul.f32 %v13, %v138
  %142 = vrot.lane.b32.xlu0 %v12, 125
  %v143 = vpop.permute.xlu0 %142
  %144 = vrot.lane.b32.xlu0 %v13, 125
  %v145 = vpop.permute.xlu0 %144
  %v148 = vsub.f32 %v12, %v143
  %v149 = vsub.f32 %v13, %v145
  %150 = vrot.lane.b32.xlu0 %v12, 122
  %v151 = vpop.permute.xlu0 %150
  %152 = vrot.lane.b32.xlu0 %v13, 122
  %v153 = vpop.permute.xlu0 %152
  %v156 = vsub.f32 %v12, %v151
  %v157 = vsub.f32 %v13, %v153
  %160 = vrot.lane.b32.xlu0 %v156, 4
  %v161 = vpop.permute.xlu0 %160
  %162 = vrot.lane.b32.xlu0 %v157, 4
  %v163 = vpop.permute.xlu0 %162
  %v166 = vmul.f32 %v148, %v161
  %v167 = vmul.f32 %v149, %v163
  %168 = vrot.lane.b32.xlu0 %v156, 5
  %v169 = vpop.permute.xlu0 %168
  %170 = vrot.lane.b32.xlu0 %v157, 5
  %v171 = vpop.permute.xlu0 %170
  %v174 = vmul.f32 %v22, %v169
  %v175 = vmul.f32 %v23, %v171
  %178 = vrot.lane.b32.xlu0 %v174, 126
  %v179 = vpop.permute.xlu0 %178
  %180 = vrot.lane.b32.xlu0 %v175, 126
  %v181 = vpop.permute.xlu0 %180
  %v184 = vadd.f32 %v166, %v179
  %v185 = vadd.f32 %v167, %v181
  %v186 = vand.u32 2147483647, %v184
  %v187 = vand.u32 2147483647, %v185
  %vm188 = vcmp.gt.f32.partialorder %v186, 1e-08
  %vm189 = vcmp.gt.f32.partialorder %v187, 1e-08
  %v190 = vsel %vm188, %v184, 1.0
  %v191 = vsel %vm189, %v185, 1.0
  %v192 = vrcp.pop %v190
  %v193 = vmul.f32 1.0, %v192
  %v194 = vrcp.pop %v191
  %v195 = vmul.f32 1.0, %v194
  %v196 = vsel %vm188, %v193, 0.0
  %v197 = vsel %vm189, %v195, 0.0
  %v199 = vlaneseq
  %v200 = vshrl.u32 %v199, 7
  %v201 = vsub.s32 0, %v200
  %v202 = vrot.slane %v11, %v201
  %v203 = vlaneseq
  %v204 = vshrl.u32 %v203, 7
  %v205 = vsub.s32 2, %v204
  %v206 = vrot.slane %v11, %v205
  %v209 = vlaneseq
  %v210 = vshrl.u32 %v209, 7
  %v211 = vsub.s32 0, %v210
  %v212 = vrot.slane %v202, %v211
  %v213 = vlaneseq
  %v214 = vshrl.u32 %v213, 7
  %v215 = vsub.s32 0, %v214
  %v216 = vrot.slane %v206, %v215
  %217 = vset.pattern.permute.xlu0 6
  %218 = vperm.xlu0 %217, %v12
  %v219 = vpop.permute.xlu0 %218
  %221 = vset.pattern.permute.xlu0 6
  %222 = vperm.xlu0 %221, %v13
  %v223 = vpop.permute.xlu0 %222
  %v225 = vsub.f32 %v212, %v219
  %v226 = vsub.f32 %v216, %v219
  %v227 = vsub.f32 %v212, %v223
  %v228 = vsub.f32 %v216, %v223
  %230 = vset.pattern.permute.xlu0 4
  %231 = vperm.xlu0 %230, %v148
  %v232 = vpop.permute.xlu0 %231
  %235 = vset.pattern.permute.xlu0 4
  %236 = vperm.xlu0 %235, %v149
  %v237 = vpop.permute.xlu0 %236
  %v239 = vmul.f32 %v232, %v225
  %v240 = vmul.f32 %v232, %v226
  %v241 = vmul.f32 %v237, %v227
  %v242 = vmul.f32 %v237, %v228
  %v243 = vlaneseq
  %v244 = vshrl.u32 %v243, 7
  %v245 = vsub.s32 1, %v244
  %v246 = vrot.slane %v11, %v245
  %v247 = vlaneseq
  %v248 = vshrl.u32 %v247, 7
  %v249 = vsub.s32 3, %v248
  %v250 = vrot.slane %v11, %v249
  %v253 = vlaneseq
  %v254 = vshrl.u32 %v253, 7
  %v255 = vsub.s32 1, %v254
  %v256 = vrot.slane %v246, %v255
  %v257 = vlaneseq
  %v258 = vshrl.u32 %v257, 7
  %v259 = vsub.s32 1, %v258
  %v260 = vrot.slane %v250, %v259
  %261 = vset.pattern.permute.xlu0 7
  %262 = vperm.xlu0 %261, %v12
  %v263 = vpop.permute.xlu0 %262
  %265 = vset.pattern.permute.xlu0 7
  %266 = vperm.xlu0 %265, %v13
  %v267 = vpop.permute.xlu0 %266
  %v269 = vsub.f32 %v256, %v263
  %v270 = vsub.f32 %v260, %v263
  %v271 = vsub.f32 %v256, %v267
  %v272 = vsub.f32 %v260, %v267
  %274 = vset.pattern.permute.xlu0 6
  %275 = vperm.xlu0 %274, %v22
  %v276 = vpop.permute.xlu0 %275
  %279 = vset.pattern.permute.xlu0 6
  %280 = vperm.xlu0 %279, %v23
  %v281 = vpop.permute.xlu0 %280
  %v283 = vmul.f32 %v276, %v269
  %v284 = vmul.f32 %v276, %v270
  %v285 = vmul.f32 %v281, %v271
  %v286 = vmul.f32 %v281, %v272
  %v287 = vadd.f32 %v239, %v283
  %v288 = vadd.f32 %v240, %v284
  %v289 = vadd.f32 %v241, %v285
  %v290 = vadd.f32 %v242, %v286
  %292 = vset.pattern.permute.xlu0 4
  %293 = vperm.xlu0 %292, %v196
  %v294 = vpop.permute.xlu0 %293
  %297 = vset.pattern.permute.xlu0 4
  %298 = vperm.xlu0 %297, %v197
  %v299 = vpop.permute.xlu0 %298
  %v301 = vmul.f32 %v287, %v294
  %v302 = vmul.f32 %v288, %v294
  %v303 = vmul.f32 %v289, %v299
  %v304 = vmul.f32 %v290, %v299
  %305 = vset.pattern.permute.xlu0 7
  %306 = vperm.xlu0 %305, %v30
  %v307 = vpop.permute.xlu0 %306
  %309 = vset.pattern.permute.xlu0 7
  %310 = vperm.xlu0 %309, %v31
  %v311 = vpop.permute.xlu0 %310
  %v313 = vmul.f32 %v307, %v225
  %v314 = vmul.f32 %v307, %v226
  %v315 = vmul.f32 %v311, %v227
  %v316 = vmul.f32 %v311, %v228
  %317 = vset.pattern.permute.xlu0 0
  %318 = vperm.xlu0 %317, %v156
  %v319 = vpop.permute.xlu0 %318
  %321 = vset.pattern.permute.xlu0 0
  %322 = vperm.xlu0 %321, %v157
  %v323 = vpop.permute.xlu0 %322
  %v325 = vmul.f32 %v319, %v269
  %v326 = vmul.f32 %v319, %v270
  %v327 = vmul.f32 %v323, %v271
  %v328 = vmul.f32 %v323, %v272
  %v329 = vadd.f32 %v313, %v325
  %v330 = vadd.f32 %v314, %v326
  %v331 = vadd.f32 %v315, %v327
  %v332 = vadd.f32 %v316, %v328
  %v333 = vmul.f32 %v329, %v294
  %v334 = vmul.f32 %v330, %v294
  %v335 = vmul.f32 %v331, %v299
  %v336 = vmul.f32 %v332, %v299
  %v337 = vsub.f32 1.0, %v301
  %v338 = vsub.f32 1.0, %v302
  %v339 = vsub.f32 1.0, %v303
  %v340 = vsub.f32 1.0, %v304
  %v341 = vsub.f32 %v337, %v333
  %v342 = vsub.f32 %v338, %v334
  %v343 = vsub.f32 %v339, %v335
  %v344 = vsub.f32 %v340, %v336
  %345 = vset.pattern.permute.xlu0 2
  %346 = vperm.xlu0 %345, %v12
  %v347 = vpop.permute.xlu0 %346
  %349 = vset.pattern.permute.xlu0 2
  %350 = vperm.xlu0 %349, %v13
  %v351 = vpop.permute.xlu0 %350
  %v353 = vmul.f32 %v301, %v347
  %v354 = vmul.f32 %v302, %v347
  %v355 = vmul.f32 %v303, %v351
  %v356 = vmul.f32 %v304, %v351
  %357 = vset.pattern.permute.xlu0 5
  %358 = vperm.xlu0 %357, %v12
  %v359 = vpop.permute.xlu0 %358
  %361 = vset.pattern.permute.xlu0 5
  %362 = vperm.xlu0 %361, %v13
  %v363 = vpop.permute.xlu0 %362
  %v365 = vmul.f32 %v333, %v359
  %v366 = vmul.f32 %v334, %v359
  %v367 = vmul.f32 %v335, %v363
  %v368 = vmul.f32 %v336, %v363
  %v369 = vadd.f32 %v353, %v365
  %v370 = vadd.f32 %v354, %v366
  %v371 = vadd.f32 %v355, %v367
  %v372 = vadd.f32 %v356, %v368
  %373 = vset.pattern.permute.xlu0 8
  %374 = vperm.xlu0 %373, %v12
  %v375 = vpop.permute.xlu0 %374
  %377 = vset.pattern.permute.xlu0 8
  %378 = vperm.xlu0 %377, %v13
  %v379 = vpop.permute.xlu0 %378
  %v381 = vmul.f32 %v341, %v375
  %v382 = vmul.f32 %v342, %v375
  %v383 = vmul.f32 %v343, %v379
  %v384 = vmul.f32 %v344, %v379
  %v385 = vadd.f32 %v369, %v381
  %v386 = vadd.f32 %v370, %v382
  %v387 = vadd.f32 %v371, %v383
  %v388 = vadd.f32 %v372, %v384
  %vm389 = vcmp.ge.f32.partialorder %v301, 0.0
  %vm390 = vcmp.ge.f32.partialorder %v302, 0.0
  %vm391 = vcmp.ge.f32.partialorder %v303, 0.0
  %vm392 = vcmp.ge.f32.partialorder %v304, 0.0
  %vm393 = vcmp.ge.f32.partialorder %v333, 0.0
  %vm394 = vcmp.ge.f32.partialorder %v334, 0.0
  %vm395 = vcmp.ge.f32.partialorder %v335, 0.0
  %vm396 = vcmp.ge.f32.partialorder %v336, 0.0
  %vm397 = vmand %vm389, %vm393
  %vm398 = vmand %vm390, %vm394
  %vm399 = vmand %vm391, %vm395
  %vm400 = vmand %vm392, %vm396
  %vm401 = vcmp.ge.f32.partialorder %v341, 0.0
  %vm402 = vcmp.ge.f32.partialorder %v342, 0.0
  %vm403 = vcmp.ge.f32.partialorder %v343, 0.0
  %vm404 = vcmp.ge.f32.partialorder %v344, 0.0
  %vm405 = vmand %vm397, %vm401
  %vm406 = vmand %vm398, %vm402
  %vm407 = vmand %vm399, %vm403
  %vm408 = vmand %vm400, %vm404
  %v409 = vsel %vm188, 1, 0
  %v410 = vsel %vm189, 1, 0
  %411 = vset.pattern.permute.xlu0 4
  %412 = vperm.xlu0 %411, %v409
  %v413 = vpop.permute.xlu0 %412
  %414 = vset.pattern.permute.xlu0 4
  %415 = vperm.xlu0 %414, %v410
  %v416 = vpop.permute.xlu0 %415
  %vm417 = vcmp.eq.s32.totalorder %v413, 1
  %vm418 = vcmp.eq.s32.totalorder %v416, 1
  %vm419 = vmand %vm405, %vm417
  %vm420 = vmand %vm406, %vm417
  %vm421 = vmand %vm407, %vm418
  %vm422 = vmand %vm408, %vm418
  %vm423 = vcmp.gt.f32.partialorder %v385, 0.0001
  %vm424 = vcmp.gt.f32.partialorder %v386, 0.0001
  %vm425 = vcmp.gt.f32.partialorder %v387, 0.0001
  %vm426 = vcmp.gt.f32.partialorder %v388, 0.0001
  %vm427 = vmand %vm419, %vm423
  %vm428 = vmand %vm420, %vm424
  %vm429 = vmand %vm421, %vm425
  %vm430 = vmand %vm422, %vm426
  %v431 = vlaneseq
  %v432 = vshrl.u32 %v431, 7
  %v433 = vadd.s32 %v432, 8
  %v438 = vand.u32 %v385, 4294967280
  %v439 = vand.u32 %v386, 4294967280
  %v440 = vand.u32 %v387, 4294967280
  %v441 = vand.u32 %v388, 4294967280
  %v442 = vor.u32 %v438, %v432
  %v443 = vor.u32 %v439, %v432
  %v444 = vor.u32 %v440, %v433
  %v445 = vor.u32 %v441, %v433
  %v446 = vsel %vm427, %v442, 2139095040
  %v447 = vsel %vm428, %v443, 2139095040
  %v448 = vsel %vm429, %v444, 2139095040
  %v449 = vsel %vm430, %v445, 2139095040
  %vm450 = vcmask 1043456
  %v451 = vsel %vm450, %v448, 2147483647
  %vm452 = vcmp.lt.s32.totalorder %v446, %v451
  %v453 = vsel %vm452, %v446, %v451
  %v454 = vrot.slane %v453, 4
  %vm455 = vcmp.lt.s32.totalorder %v453, %v454
  %v456 = vsel %vm455, %v453, %v454
  %v457 = vrot.slane %v456, 2
  %vm458 = vcmp.lt.s32.totalorder %v456, %v457
  %v459 = vsel %vm458, %v456, %v457
  %v460 = vrot.slane %v459, 1
  %vm461 = vcmp.lt.s32.totalorder %v459, %v460
  %v462 = vsel %vm461, %v459, %v460
  %v463 = vsel %vm450, %v449, 2147483647
  %vm464 = vcmp.lt.s32.totalorder %v447, %v463
  %v465 = vsel %vm464, %v447, %v463
  %v466 = vrot.slane %v465, 4
  %vm467 = vcmp.lt.s32.totalorder %v465, %v466
  %v468 = vsel %vm467, %v465, %v466
  %v469 = vrot.slane %v468, 2
  %vm470 = vcmp.lt.s32.totalorder %v468, %v469
  %v471 = vsel %vm470, %v468, %v469
  %v472 = vrot.slane %v471, 1
  %vm473 = vcmp.lt.s32.totalorder %v471, %v472
  %v474 = vsel %vm473, %v471, %v472
  %vm475 = vcmp.lt.s32.totalorder %v462, 2139095040
  %vm476 = vcmp.lt.s32.totalorder %v474, 2139095040
  %v477 = vand.u32 %v462, 15
  %v478 = vand.u32 %v474, 15
  %v479 = vsel %vm475, %v477, 4294967295
  %v480 = vsel %vm476, %v478, 4294967295
  %v481 = vand.u32 %v462, 4294967280
  %v482 = vand.u32 %v474, 4294967280
  %vm485 = vcmp.eq.s32.totalorder %v446, %v462
  %vm486 = vcmp.eq.s32.totalorder %v447, %v474
  %vm487 = vcmp.eq.s32.totalorder %v448, %v462
  %vm488 = vcmp.eq.s32.totalorder %v449, %v474
  %vm489 = vmand %vm427, %vm485
  %vm490 = vmand %vm428, %vm486
  %vm491 = vmand %vm429, %vm487
  %vm492 = vmand %vm430, %vm488
  %v493 = vsel %vm489, %v301, 0.0
  %v494 = vsel %vm490, %v302, 0.0
  %v495 = vsel %vm491, %v303, 0.0
  %v496 = vsel %vm492, %v304, 0.0
  %v497 = vsel %vm450, %v495, 0.0
  %v498 = vadd.f32 %v493, %v497
  %v499 = vrot.slane %v498, 4
  %v500 = vadd.f32 %v498, %v499
  %v501 = vrot.slane %v500, 2
  %v502 = vadd.f32 %v500, %v501
  %v503 = vrot.slane %v502, 1
  %v504 = vadd.f32 %v502, %v503
  %v505 = vsel %vm450, %v496, 0.0
  %v506 = vadd.f32 %v494, %v505
  %v507 = vrot.slane %v506, 4
  %v508 = vadd.f32 %v506, %v507
  %v509 = vrot.slane %v508, 2
  %v510 = vadd.f32 %v508, %v509
  %v511 = vrot.slane %v510, 1
  %v512 = vadd.f32 %v510, %v511
  %v513 = vsel %vm489, %v333, 0.0
  %v514 = vsel %vm490, %v334, 0.0
  %v515 = vsel %vm491, %v335, 0.0
  %v516 = vsel %vm492, %v336, 0.0
  %v517 = vsel %vm450, %v515, 0.0
  %v518 = vadd.f32 %v513, %v517
  %v519 = vrot.slane %v518, 4
  %v520 = vadd.f32 %v518, %v519
  %v521 = vrot.slane %v520, 2
  %v522 = vadd.f32 %v520, %v521
  %v523 = vrot.slane %v522, 1
  %v524 = vadd.f32 %v522, %v523
  %v525 = vsel %vm450, %v516, 0.0
  %v526 = vadd.f32 %v514, %v525
  %v527 = vrot.slane %v526, 4
  %v528 = vadd.f32 %v526, %v527
  %v529 = vrot.slane %v528, 2
  %v530 = vadd.f32 %v528, %v529
  %v531 = vrot.slane %v530, 1
  %v532 = vadd.f32 %v530, %v531
  %v533 = vsel %vm489, %v341, 0.0
  %v534 = vsel %vm490, %v342, 0.0
  %v535 = vsel %vm491, %v343, 0.0
  %v536 = vsel %vm492, %v344, 0.0
  %v537 = vsel %vm450, %v535, 0.0
  %v538 = vadd.f32 %v533, %v537
  %v539 = vrot.slane %v538, 4
  %v540 = vadd.f32 %v538, %v539
  %v541 = vrot.slane %v540, 2
  %v542 = vadd.f32 %v540, %v541
  %v543 = vrot.slane %v542, 1
  %v544 = vadd.f32 %v542, %v543
  %v545 = vsel %vm450, %v536, 0.0
  %v546 = vadd.f32 %v534, %v545
  %v547 = vrot.slane %v546, 4
  %v548 = vadd.f32 %v546, %v547
  %v549 = vrot.slane %v548, 2
  %v550 = vadd.f32 %v548, %v549
  %v551 = vrot.slane %v550, 1
  %v552 = vadd.f32 %v550, %v551
  %v553 = vsel %vm489, 1, 0
  %v554 = vsel %vm490, 1, 0
  %v555 = vsel %vm491, 1, 0
  %v556 = vsel %vm492, 1, 0
  %v557 = vcvt.s32.f32 %v553
  %v558 = vcvt.s32.f32 %v554
  %v559 = vcvt.s32.f32 %v555
  %v560 = vcvt.s32.f32 %v556
  %563 = vrot.lane.b32.xlu0 %v140, 110
  %v564 = vpop.permute.xlu0 %563
  %565 = vrot.lane.b32.xlu0 %v141, 110
  %v566 = vpop.permute.xlu0 %565
  %569 = vxpose.xlu0.b32.start [1/16] %v564, 128
  %570 = vxpose.xlu0.b32.cont [2/16] %v566, 128
  %571 = vxpose.xlu0.b32.cont [3/16] 0.0, 128
  %572 = vxpose.xlu0.b32.cont [4/16] 0.0, 128
  %573 = vxpose.xlu0.b32.cont [5/16] 0.0, 128
  %574 = vxpose.xlu0.b32.cont [6/16] 0.0, 128
  %575 = vxpose.xlu0.b32.cont [7/16] 0.0, 128
  %576 = vxpose.xlu0.b32.cont [8/16] 0.0, 128
  %577 = vxpose.xlu0.b32.cont [9/16] 0.0, 128
  %578 = vxpose.xlu0.b32.cont [10/16] 0.0, 128
  %579 = vxpose.xlu0.b32.cont [11/16] 0.0, 128
  %580 = vxpose.xlu0.b32.cont [12/16] 0.0, 128
  %581 = vxpose.xlu0.b32.cont [13/16] 0.0, 128
  %582 = vxpose.xlu0.b32.cont [14/16] 0.0, 128
  %583 = vxpose.xlu0.b32.cont [15/16] 0.0, 128
  %584 = vxpose.xlu0.b32.end [16/16] 0.0, 128
  %v585 = vpop.trf.xlu0
  %v586 = vpop.trf.xlu0
  %v587 = vpop.trf.xlu0
  %v588 = vpop.trf.xlu0
  %v589 = vpop.trf.xlu0
  %v590 = vpop.trf.xlu0
  %v591 = vpop.trf.xlu0
  %v592 = vpop.trf.xlu0
  %v593 = vpop.trf.xlu0
  %v594 = vpop.trf.xlu0
  %v595 = vpop.trf.xlu0
  %v596 = vpop.trf.xlu0
  %v597 = vpop.trf.xlu0
  %v598 = vpop.trf.xlu0
  %v599 = vpop.trf.xlu0
  %v600 = vpop.trf.xlu0
  %vm601 = vcmask 97280
  %v603 = vsel %vm601, %v585, 0
  %v606 = vsel %vm601, %v586, 0
  %v609 = vsel %vm450, %v559, 0
  %v612 = vsel %vm450, %v560, 0
  %614 = vmatprep.subr.mxu0 0.0
  %615 = vmatpush1.msra.mxu0 0.0
  %616 = vmatprep.subr.mxu0 0.0
  %617 = vmatpush1.msra.mxu0 0.0
  %618 = vmatprep.subr.mxu0 0.0
  %619 = vmatpush1.msra.mxu0 0.0
  %620 = vmatprep.subr.mxu0 0.0
  %621 = vmatpush1.msra.mxu0 0.0
  %622 = vmatprep.subr.mxu0 0.0
  %623 = vmatpush1.msra.mxu0 0.0
  %624 = vmatprep.subr.mxu0 0.0
  %625 = vmatpush1.msra.mxu0 0.0
  %626 = vmatprep.subr.mxu0 0.0
  %627 = vmatpush1.msra.mxu0 0.0
  %628 = vmatprep.subr.mxu0 0.0
  %629 = vmatpush1.msra.mxu0 0.0
  %630 = vmatprep.subr.mxu0 0.0
  %631 = vmatpush1.msra.mxu0 0.0
  %632 = vmatprep.subr.mxu0 0.0
  %633 = vmatpush1.msra.mxu0 0.0
  %634 = vmatprep.subr.mxu0 0.0
  %635 = vmatpush1.msra.mxu0 0.0
  %636 = vmatprep.subr.mxu0 0.0
  %637 = vmatpush1.msra.mxu0 0.0
  %638 = vmatprep.subr.mxu0 0.0
  %639 = vmatpush1.msra.mxu0 0.0
  %640 = vmatprep.subr.mxu0 0.0
  %641 = vmatpush1.msra.mxu0 0.0
  %642 = vmatprep.subr.mxu0 %v612
  %643 = vmatpush1.msra.mxu0 %v609
  %644 = vmatprep.subr.mxu0 %v558
  %645 = vmatpush1.msra.mxu0 %v557
  %646 = vmatprep.subr.mxu0 0.0
  %647 = vmatpush2.msra.mxu0 0.0
  %648 = vmatprep.subr.mxu0 0.0
  %649 = vmatpush2.msra.mxu0 0.0
  %650 = vmatprep.subr.mxu0 0.0
  %651 = vmatpush2.msra.mxu0 0.0
  %652 = vmatprep.subr.mxu0 0.0
  %653 = vmatpush2.msra.mxu0 0.0
  %654 = vmatprep.subr.mxu0 0.0
  %655 = vmatpush2.msra.mxu0 0.0
  %656 = vmatprep.subr.mxu0 0.0
  %657 = vmatpush2.msra.mxu0 0.0
  %658 = vmatprep.subr.mxu0 0.0
  %659 = vmatpush2.msra.mxu0 0.0
  %660 = vmatprep.subr.mxu0 0.0
  %661 = vmatpush2.msra.mxu0 0.0
  %662 = vmatprep.subr.mxu0 0.0
  %663 = vmatpush2.msra.mxu0 0.0
  %664 = vmatprep.subr.mxu0 0.0
  %665 = vmatpush2.msra.mxu0 0.0
  %666 = vmatprep.subr.mxu0 0.0
  %667 = vmatpush2.msra.mxu0 0.0
  %668 = vmatprep.subr.mxu0 0.0
  %669 = vmatpush2.msra.mxu0 0.0
  %670 = vmatprep.subr.mxu0 0.0
  %671 = vmatpush2.msra.mxu0 0.0
  %672 = vmatprep.subr.mxu0 0.0
  %673 = vmatpush2.msra.mxu0 0.0
  %674 = vmatprep.subr.mxu0 0.0
  %675 = vmatpush2.msra.mxu0 0.0
  %676 = vmatprep.subr.mxu0 0.0
  %677 = vmatpush2.msra.mxu0 0.0
  %678 = vmatprep.mubr.f32.mxu0 0.0
  %679 = vmatmul.mubr.f32.gmra.mxu0 %v603
  %v680 = vpop.f32.mrf.mxu0
  %v681 = vadd.f32 0.0, %v680
  %v682 = vpop.f32.mrf.mxu0
  %v683 = vadd.f32 0.0, %v682
  %684 = vmatprep.mubr.f32.mxu0 0.0
  %685 = vmatmul.mubr.f32.gmra.mxu0 %v606
  %v686 = vpop.f32.mrf.mxu0
  %v687 = vadd.f32 0.0, %v686
  %v688 = vpop.f32.mrf.mxu0
  %v689 = vadd.f32 0.0, %v688
  %690 = vdwg.mxu0
  %v691 = vmul.f32 %v681, %v504
  %v692 = vmul.f32 %v683, %v512
  %v693 = vmul.f32 %v681, %v524
  %v694 = vmul.f32 %v683, %v532
  %v697 = vrot.slane %v693, 3
  %v698 = vrot.slane %v694, 3
  %v701 = vadd.f32 %v691, %v697
  %v702 = vadd.f32 %v692, %v698
  %v703 = vmul.f32 %v681, %v544
  %v704 = vmul.f32 %v683, %v552
  %v707 = vrot.slane %v703, 6
  %v708 = vrot.slane %v704, 6
  %v711 = vadd.f32 %v701, %v707
  %v712 = vadd.f32 %v702, %v708
  %v713 = vsel %vm475, %v711, 1.0
  %v714 = vsel %vm476, %v712, 1.0
  %v715 = vmul.f32 %v687, %v544
  %v716 = vmul.f32 %v689, %v552
  %v719 = vrot.slane %v715, 6
  %v720 = vrot.slane %v716, 6
  %v723 = vadd.f32 %v701, %v719
  %v724 = vadd.f32 %v702, %v720
  %v725 = vsel %vm475, %v723, 1.0
  %v726 = vsel %vm476, %v724, 1.0
  %v727 = vsel %vm475, %v481, -1.0
  %v728 = vsel %vm476, %v482, -1.0
  %v729 = vsel %vm475, %v504, -1.0
  %v730 = vsel %vm476, %v512, -1.0
  %v731 = vsel %vm475, %v524, -1.0
  %v732 = vsel %vm476, %v532, -1.0
  %v733 = vsel %vm475, %v544, -1.0
  %v734 = vsel %vm476, %v552, -1.0
  %vm737 = vcmask 1041408
  %v738 = vsel %vm737, %v713, %v725
  %v739 = vsel %vm737, %v714, %v726
  %vm740 = vcmask 1042432
  %v741 = vsel %vm740, %v738, %v727
  %v742 = vsel %vm740, %v739, %v728
  %v743 = vsel %vm450, %v741, %v729
  %v744 = vsel %vm450, %v742, %v730
  %vm745 = vcmask 1044480
  %v746 = vsel %vm745, %v743, %v731
  %v747 = vsel %vm745, %v744, %v732
  %vm748 = vcmask 1045504
  %v749 = vsel %vm748, %v746, %v733
  %v750 = vsel %vm748, %v747, %v734
  %vm751 = vcmask 1046528
  %v752 = vsel %vm751, %v749, %v479
  %v753 = vsel %vm751, %v750, %v480
  %754 = vst [vmem:[%s2] sm:$0xff] %v752
  %755 = vst [vmem:[%s2 + $0x8] sm:$0xff] %v753
  %s756 = scalar_lea.vmem %s1, 16
  %v757 = vld [vmem:[%s756] sm:$0xff]
  %v758 = vld [vmem:[%s756 + $0x8] sm:$0xf]
  %761 = vrot.lane.b32.xlu0 %v757, 3
  %v762 = vpop.permute.xlu0 %761
  %763 = vrot.lane.b32.xlu0 %v758, 3
  %v764 = vpop.permute.xlu0 %763
  %v767 = vsub.f32 %v757, %v762
  %v768 = vsub.f32 %v758, %v764
  %769 = vrot.lane.b32.xlu0 %v757, 6
  %v770 = vpop.permute.xlu0 %769
  %771 = vrot.lane.b32.xlu0 %v758, 6
  %v772 = vpop.permute.xlu0 %771
  %v775 = vsub.f32 %v757, %v770
  %v776 = vsub.f32 %v758, %v772
  %779 = vrot.lane.b32.xlu0 %v775, 124
  %v780 = vpop.permute.xlu0 %779
  %781 = vrot.lane.b32.xlu0 %v776, 124
  %v782 = vpop.permute.xlu0 %781
  %v785 = vmul.f32 %v767, %v780
  %v786 = vmul.f32 %v768, %v782
  %787 = vrot.lane.b32.xlu0 %v775, 126
  %v788 = vpop.permute.xlu0 %787
  %789 = vrot.lane.b32.xlu0 %v776, 126
  %v790 = vpop.permute.xlu0 %789
  %v793 = vmul.f32 %v767, %v788
  %v794 = vmul.f32 %v768, %v790
  %797 = vrot.lane.b32.xlu0 %v793, 127
  %v798 = vpop.permute.xlu0 %797
  %799 = vrot.lane.b32.xlu0 %v794, 127
  %v800 = vpop.permute.xlu0 %799
  %v803 = vsub.f32 %v785, %v798
  %v804 = vsub.f32 %v786, %v800
  %805 = vrot.lane.b32.xlu0 %v775, 127
  %v806 = vpop.permute.xlu0 %805
  %807 = vrot.lane.b32.xlu0 %v776, 127
  %v808 = vpop.permute.xlu0 %807
  %v811 = vmul.f32 %v767, %v806
  %v812 = vmul.f32 %v768, %v808
  %813 = vrot.lane.b32.xlu0 %v775, 123
  %v814 = vpop.permute.xlu0 %813
  %815 = vrot.lane.b32.xlu0 %v776, 123
  %v816 = vpop.permute.xlu0 %815
  %v819 = vmul.f32 %v767, %v814
  %v820 = vmul.f32 %v768, %v816
  %823 = vrot.lane.b32.xlu0 %v819, 2
  %v824 = vpop.permute.xlu0 %823
  %825 = vrot.lane.b32.xlu0 %v820, 2
  %v826 = vpop.permute.xlu0 %825
  %v829 = vsub.f32 %v811, %v824
  %v830 = vsub.f32 %v812, %v826
  %v831 = vmul.f32 %v803, %v803
  %v832 = vmul.f32 %v804, %v804
  %v833 = vmul.f32 %v829, %v829
  %v834 = vmul.f32 %v830, %v830
  %837 = vrot.lane.b32.xlu0 %v833, 127
  %v838 = vpop.permute.xlu0 %837
  %839 = vrot.lane.b32.xlu0 %v834, 127
  %v840 = vpop.permute.xlu0 %839
  %v843 = vadd.f32 %v831, %v838
  %v844 = vadd.f32 %v832, %v840
  %847 = vrot.lane.b32.xlu0 %v831, 1
  %v848 = vpop.permute.xlu0 %847
  %849 = vrot.lane.b32.xlu0 %v832, 1
  %v850 = vpop.permute.xlu0 %849
  %v853 = vadd.f32 %v843, %v848
  %v854 = vadd.f32 %v844, %v850
  %v855 = vadd.f32 %v853, 1e-12
  %v856 = vadd.f32 %v854, 1e-12
  %v857 = vrsqrt.pop %v855
  %v858 = vrsqrt.pop %v856
  %861 = vrot.lane.b32.xlu0 %v857, 127
  %v862 = vpop.permute.xlu0 %861
  %863 = vrot.lane.b32.xlu0 %v858, 127
  %v864 = vpop.permute.xlu0 %863
  %v867 = vmul.f32 %v803, %v862
  %v868 = vmul.f32 %v804, %v864
  %v869 = vmax.f32 %v867, 0.0
  %v870 = vmax.f32 %v868, 0.0
  %v871 = vmul.f32 %v869, 0.7
  %v872 = vmul.f32 %v870, 0.7
  %v873 = vadd.f32 %v871, 0.3
  %v874 = vadd.f32 %v872, 0.3
  %876 = vset.pattern.permute.xlu0 12
  %877 = vperm.xlu0 %876, %v873
  %v878 = vpop.permute.xlu0 %877
  %881 = vset.pattern.permute.xlu0 12
  %882 = vperm.xlu0 %881, %v874
  %v883 = vpop.permute.xlu0 %882
  %v885 = vmul.f32 %v757, %v878
  %v886 = vmul.f32 %v758, %v883
  %887 = vrot.lane.b32.xlu0 %v757, 125
  %v888 = vpop.permute.xlu0 %887
  %889 = vrot.lane.b32.xlu0 %v758, 125
  %v890 = vpop.permute.xlu0 %889
  %v893 = vsub.f32 %v757, %v888
  %v894 = vsub.f32 %v758, %v890
  %895 = vrot.lane.b32.xlu0 %v757, 122
  %v896 = vpop.permute.xlu0 %895
  %897 = vrot.lane.b32.xlu0 %v758, 122
  %v898 = vpop.permute.xlu0 %897
  %v901 = vsub.f32 %v757, %v896
  %v902 = vsub.f32 %v758, %v898
  %905 = vrot.lane.b32.xlu0 %v901, 4
  %v906 = vpop.permute.xlu0 %905
  %907 = vrot.lane.b32.xlu0 %v902, 4
  %v908 = vpop.permute.xlu0 %907
  %v911 = vmul.f32 %v893, %v906
  %v912 = vmul.f32 %v894, %v908
  %913 = vrot.lane.b32.xlu0 %v901, 5
  %v914 = vpop.permute.xlu0 %913
  %915 = vrot.lane.b32.xlu0 %v902, 5
  %v916 = vpop.permute.xlu0 %915
  %v919 = vmul.f32 %v767, %v914
  %v920 = vmul.f32 %v768, %v916
  %923 = vrot.lane.b32.xlu0 %v919, 126
  %v924 = vpop.permute.xlu0 %923
  %925 = vrot.lane.b32.xlu0 %v920, 126
  %v926 = vpop.permute.xlu0 %925
  %v929 = vadd.f32 %v911, %v924
  %v930 = vadd.f32 %v912, %v926
  %v931 = vand.u32 2147483647, %v929
  %v932 = vand.u32 2147483647, %v930
  %vm933 = vcmp.gt.f32.partialorder %v931, 1e-08
  %vm934 = vcmp.gt.f32.partialorder %v932, 1e-08
  %v935 = vsel %vm933, %v929, 1.0
  %v936 = vsel %vm934, %v930, 1.0
  %v937 = vrcp.pop %v935
  %v938 = vmul.f32 1.0, %v937
  %v939 = vrcp.pop %v936
  %v940 = vmul.f32 1.0, %v939
  %v941 = vsel %vm933, %v938, 0.0
  %v942 = vsel %vm934, %v940, 0.0
  %943 = vset.pattern.permute.xlu0 6
  %944 = vperm.xlu0 %943, %v757
  %v945 = vpop.permute.xlu0 %944
  %947 = vset.pattern.permute.xlu0 6
  %948 = vperm.xlu0 %947, %v758
  %v949 = vpop.permute.xlu0 %948
  %v951 = vsub.f32 %v212, %v945
  %v952 = vsub.f32 %v216, %v945
  %v953 = vsub.f32 %v212, %v949
  %v954 = vsub.f32 %v216, %v949
  %956 = vset.pattern.permute.xlu0 4
  %957 = vperm.xlu0 %956, %v893
  %v958 = vpop.permute.xlu0 %957
  %961 = vset.pattern.permute.xlu0 4
  %962 = vperm.xlu0 %961, %v894
  %v963 = vpop.permute.xlu0 %962
  %v965 = vmul.f32 %v958, %v951
  %v966 = vmul.f32 %v958, %v952
  %v967 = vmul.f32 %v963, %v953
  %v968 = vmul.f32 %v963, %v954
  %969 = vset.pattern.permute.xlu0 7
  %970 = vperm.xlu0 %969, %v757
  %v971 = vpop.permute.xlu0 %970
  %973 = vset.pattern.permute.xlu0 7
  %974 = vperm.xlu0 %973, %v758
  %v975 = vpop.permute.xlu0 %974
  %v977 = vsub.f32 %v256, %v971
  %v978 = vsub.f32 %v260, %v971
  %v979 = vsub.f32 %v256, %v975
  %v980 = vsub.f32 %v260, %v975
  %982 = vset.pattern.permute.xlu0 6
  %983 = vperm.xlu0 %982, %v767
  %v984 = vpop.permute.xlu0 %983
  %987 = vset.pattern.permute.xlu0 6
  %988 = vperm.xlu0 %987, %v768
  %v989 = vpop.permute.xlu0 %988
  %v991 = vmul.f32 %v984, %v977
  %v992 = vmul.f32 %v984, %v978
  %v993 = vmul.f32 %v989, %v979
  %v994 = vmul.f32 %v989, %v980
  %v995 = vadd.f32 %v965, %v991
  %v996 = vadd.f32 %v966, %v992
  %v997 = vadd.f32 %v967, %v993
  %v998 = vadd.f32 %v968, %v994
  %1000 = vset.pattern.permute.xlu0 4
  %1001 = vperm.xlu0 %1000, %v941
  %v1002 = vpop.permute.xlu0 %1001
  %1005 = vset.pattern.permute.xlu0 4
  %1006 = vperm.xlu0 %1005, %v942
  %v1007 = vpop.permute.xlu0 %1006
  %v1009 = vmul.f32 %v995, %v1002
  %v1010 = vmul.f32 %v996, %v1002
  %v1011 = vmul.f32 %v997, %v1007
  %v1012 = vmul.f32 %v998, %v1007
  %1013 = vset.pattern.permute.xlu0 7
  %1014 = vperm.xlu0 %1013, %v775
  %v1015 = vpop.permute.xlu0 %1014
  %1017 = vset.pattern.permute.xlu0 7
  %1018 = vperm.xlu0 %1017, %v776
  %v1019 = vpop.permute.xlu0 %1018
  %v1021 = vmul.f32 %v1015, %v951
  %v1022 = vmul.f32 %v1015, %v952
  %v1023 = vmul.f32 %v1019, %v953
  %v1024 = vmul.f32 %v1019, %v954
  %1025 = vset.pattern.permute.xlu0 0
  %1026 = vperm.xlu0 %1025, %v901
  %v1027 = vpop.permute.xlu0 %1026
  %1029 = vset.pattern.permute.xlu0 0
  %1030 = vperm.xlu0 %1029, %v902
  %v1031 = vpop.permute.xlu0 %1030
  %v1033 = vmul.f32 %v1027, %v977
  %v1034 = vmul.f32 %v1027, %v978
  %v1035 = vmul.f32 %v1031, %v979
  %v1036 = vmul.f32 %v1031, %v980
  %v1037 = vadd.f32 %v1021, %v1033
  %v1038 = vadd.f32 %v1022, %v1034
  %v1039 = vadd.f32 %v1023, %v1035
  %v1040 = vadd.f32 %v1024, %v1036
  %v1041 = vmul.f32 %v1037, %v1002
  %v1042 = vmul.f32 %v1038, %v1002
  %v1043 = vmul.f32 %v1039, %v1007
  %v1044 = vmul.f32 %v1040, %v1007
  %v1045 = vsub.f32 1.0, %v1009
  %v1046 = vsub.f32 1.0, %v1010
  %v1047 = vsub.f32 1.0, %v1011
  %v1048 = vsub.f32 1.0, %v1012
  %v1049 = vsub.f32 %v1045, %v1041
  %v1050 = vsub.f32 %v1046, %v1042
  %v1051 = vsub.f32 %v1047, %v1043
  %v1052 = vsub.f32 %v1048, %v1044
  %1053 = vset.pattern.permute.xlu0 2
  %1054 = vperm.xlu0 %1053, %v757
  %v1055 = vpop.permute.xlu0 %1054
  %1057 = vset.pattern.permute.xlu0 2
  %1058 = vperm.xlu0 %1057, %v758
  %v1059 = vpop.permute.xlu0 %1058
  %v1061 = vmul.f32 %v1009, %v1055
  %v1062 = vmul.f32 %v1010, %v1055
  %v1063 = vmul.f32 %v1011, %v1059
  %v1064 = vmul.f32 %v1012, %v1059
  %1065 = vset.pattern.permute.xlu0 5
  %1066 = vperm.xlu0 %1065, %v757
  %v1067 = vpop.permute.xlu0 %1066
  %1069 = vset.pattern.permute.xlu0 5
  %1070 = vperm.xlu0 %1069, %v758
  %v1071 = vpop.permute.xlu0 %1070
  %v1073 = vmul.f32 %v1041, %v1067
  %v1074 = vmul.f32 %v1042, %v1067
  %v1075 = vmul.f32 %v1043, %v1071
  %v1076 = vmul.f32 %v1044, %v1071
  %v1077 = vadd.f32 %v1061, %v1073
  %v1078 = vadd.f32 %v1062, %v1074
  %v1079 = vadd.f32 %v1063, %v1075
  %v1080 = vadd.f32 %v1064, %v1076
  %1081 = vset.pattern.permute.xlu0 8
  %1082 = vperm.xlu0 %1081, %v757
  %v1083 = vpop.permute.xlu0 %1082
  %1085 = vset.pattern.permute.xlu0 8
  %1086 = vperm.xlu0 %1085, %v758
  %v1087 = vpop.permute.xlu0 %1086
  %v1089 = vmul.f32 %v1049, %v1083
  %v1090 = vmul.f32 %v1050, %v1083
  %v1091 = vmul.f32 %v1051, %v1087
  %v1092 = vmul.f32 %v1052, %v1087
  %v1093 = vadd.f32 %v1077, %v1089
  %v1094 = vadd.f32 %v1078, %v1090
  %v1095 = vadd.f32 %v1079, %v1091
  %v1096 = vadd.f32 %v1080, %v1092
  %vm1097 = vcmp.ge.f32.partialorder %v1009, 0.0
  %vm1098 = vcmp.ge.f32.partialorder %v1010, 0.0
  %vm1099 = vcmp.ge.f32.partialorder %v1011, 0.0
  %vm1100 = vcmp.ge.f32.partialorder %v1012, 0.0
  %vm1101 = vcmp.ge.f32.partialorder %v1041, 0.0
  %vm1102 = vcmp.ge.f32.partialorder %v1042, 0.0
  %vm1103 = vcmp.ge.f32.partialorder %v1043, 0.0
  %vm1104 = vcmp.ge.f32.partialorder %v1044, 0.0
  %vm1105 = vmand %vm1097, %vm1101
  %vm1106 = vmand %vm1098, %vm1102
  %vm1107 = vmand %vm1099, %vm1103
  %vm1108 = vmand %vm1100, %vm1104
  %vm1109 = vcmp.ge.f32.partialorder %v1049, 0.0
  %vm1110 = vcmp.ge.f32.partialorder %v1050, 0.0
  %vm1111 = vcmp.ge.f32.partialorder %v1051, 0.0
  %vm1112 = vcmp.ge.f32.partialorder %v1052, 0.0
  %vm1113 = vmand %vm1105, %vm1109
  %vm1114 = vmand %vm1106, %vm1110
  %vm1115 = vmand %vm1107, %vm1111
  %vm1116 = vmand %vm1108, %vm1112
  %v1117 = vsel %vm933, 1, 0
  %v1118 = vsel %vm934, 1, 0
  %1119 = vset.pattern.permute.xlu0 4
  %1120 = vperm.xlu0 %1119, %v1117
  %v1121 = vpop.permute.xlu0 %1120
  %1122 = vset.pattern.permute.xlu0 4
  %1123 = vperm.xlu0 %1122, %v1118
  %v1124 = vpop.permute.xlu0 %1123
  %vm1125 = vcmp.eq.s32.totalorder %v1121, 1
  %vm1126 = vcmp.eq.s32.totalorder %v1124, 1
  %vm1127 = vmand %vm1113, %vm1125
  %vm1128 = vmand %vm1114, %vm1125
  %vm1129 = vmand %vm1115, %vm1126
  %vm1130 = vmand %vm1116, %vm1126
  %vm1131 = vcmp.gt.f32.partialorder %v1093, 0.0001
  %vm1132 = vcmp.gt.f32.partialorder %v1094, 0.0001
  %vm1133 = vcmp.gt.f32.partialorder %v1095, 0.0001
  %vm1134 = vcmp.gt.f32.partialorder %v1096, 0.0001
  %vm1135 = vmand %vm1127, %vm1131
  %vm1136 = vmand %vm1128, %vm1132
  %vm1137 = vmand %vm1129, %vm1133
  %vm1138 = vmand %vm1130, %vm1134
  %v1143 = vand.u32 %v1093, 4294967280
  %v1144 = vand.u32 %v1094, 4294967280
  %v1145 = vand.u32 %v1095, 4294967280
  %v1146 = vand.u32 %v1096, 4294967280
  %v1147 = vor.u32 %v1143, %v432
  %v1148 = vor.u32 %v1144, %v432
  %v1149 = vor.u32 %v1145, %v433
  %v1150 = vor.u32 %v1146, %v433
  %v1151 = vsel %vm1135, %v1147, 2139095040
  %v1152 = vsel %vm1136, %v1148, 2139095040
  %v1153 = vsel %vm1137, %v1149, 2139095040
  %v1154 = vsel %vm1138, %v1150, 2139095040
  %v1155 = vsel %vm450, %v1153, 2147483647
  %vm1156 = vcmp.lt.s32.totalorder %v1151, %v1155
  %v1157 = vsel %vm1156, %v1151, %v1155
  %v1158 = vrot.slane %v1157, 4
  %vm1159 = vcmp.lt.s32.totalorder %v1157, %v1158
  %v1160 = vsel %vm1159, %v1157, %v1158
  %v1161 = vrot.slane %v1160, 2
  %vm1162 = vcmp.lt.s32.totalorder %v1160, %v1161
  %v1163 = vsel %vm1162, %v1160, %v1161
  %v1164 = vrot.slane %v1163, 1
  %vm1165 = vcmp.lt.s32.totalorder %v1163, %v1164
  %v1166 = vsel %vm1165, %v1163, %v1164
  %v1167 = vsel %vm450, %v1154, 2147483647
  %vm1168 = vcmp.lt.s32.totalorder %v1152, %v1167
  %v1169 = vsel %vm1168, %v1152, %v1167
  %v1170 = vrot.slane %v1169, 4
  %vm1171 = vcmp.lt.s32.totalorder %v1169, %v1170
  %v1172 = vsel %vm1171, %v1169, %v1170
  %v1173 = vrot.slane %v1172, 2
  %vm1174 = vcmp.lt.s32.totalorder %v1172, %v1173
  %v1175 = vsel %vm1174, %v1172, %v1173
  %v1176 = vrot.slane %v1175, 1
  %vm1177 = vcmp.lt.s32.totalorder %v1175, %v1176
  %v1178 = vsel %vm1177, %v1175, %v1176
  %vm1179 = vcmp.lt.s32.totalorder %v1166, 2139095040
  %vm1180 = vcmp.lt.s32.totalorder %v1178, 2139095040
  %v1181 = vand.u32 %v1166, 15
  %v1182 = vand.u32 %v1178, 15
  %v1183 = vsel %vm1179, %v1181, 4294967295
  %v1184 = vsel %vm1180, %v1182, 4294967295
  %v1185 = vand.u32 %v1166, 4294967280
  %v1186 = vand.u32 %v1178, 4294967280
  %vm1189 = vcmp.eq.s32.totalorder %v1151, %v1166
  %vm1190 = vcmp.eq.s32.totalorder %v1152, %v1178
  %vm1191 = vcmp.eq.s32.totalorder %v1153, %v1166
  %vm1192 = vcmp.eq.s32.totalorder %v1154, %v1178
  %vm1193 = vmand %vm1135, %vm1189
  %vm1194 = vmand %vm1136, %vm1190
  %vm1195 = vmand %vm1137, %vm1191
  %vm1196 = vmand %vm1138, %vm1192
  %v1197 = vsel %vm1193, %v1009, 0.0
  %v1198 = vsel %vm1194, %v1010, 0.0
  %v1199 = vsel %vm1195, %v1011, 0.0
  %v1200 = vsel %vm1196, %v1012, 0.0
  %v1201 = vsel %vm450, %v1199, 0.0
  %v1202 = vadd.f32 %v1197, %v1201
  %v1203 = vrot.slane %v1202, 4
  %v1204 = vadd.f32 %v1202, %v1203
  %v1205 = vrot.slane %v1204, 2
  %v1206 = vadd.f32 %v1204, %v1205
  %v1207 = vrot.slane %v1206, 1
  %v1208 = vadd.f32 %v1206, %v1207
  %v1209 = vsel %vm450, %v1200, 0.0
  %v1210 = vadd.f32 %v1198, %v1209
  %v1211 = vrot.slane %v1210, 4
  %v1212 = vadd.f32 %v1210, %v1211
  %v1213 = vrot.slane %v1212, 2
  %v1214 = vadd.f32 %v1212, %v1213
  %v1215 = vrot.slane %v1214, 1
  %v1216 = vadd.f32 %v1214, %v1215
  %v1217 = vsel %vm1193, %v1041, 0.0
  %v1218 = vsel %vm1194, %v1042, 0.0
  %v1219 = vsel %vm1195, %v1043, 0.0
  %v1220 = vsel %vm1196, %v1044, 0.0
  %v1221 = vsel %vm450, %v1219, 0.0
  %v1222 = vadd.f32 %v1217, %v1221
  %v1223 = vrot.slane %v1222, 4
  %v1224 = vadd.f32 %v1222, %v1223
  %v1225 = vrot.slane %v1224, 2
  %v1226 = vadd.f32 %v1224, %v1225
  %v1227 = vrot.slane %v1226, 1
  %v1228 = vadd.f32 %v1226, %v1227
  %v1229 = vsel %vm450, %v1220, 0.0
  %v1230 = vadd.f32 %v1218, %v1229
  %v1231 = vrot.slane %v1230, 4
  %v1232 = vadd.f32 %v1230, %v1231
  %v1233 = vrot.slane %v1232, 2
  %v1234 = vadd.f32 %v1232, %v1233
  %v1235 = vrot.slane %v1234, 1
  %v1236 = vadd.f32 %v1234, %v1235
  %v1237 = vsel %vm1193, %v1049, 0.0
  %v1238 = vsel %vm1194, %v1050, 0.0
  %v1239 = vsel %vm1195, %v1051, 0.0
  %v1240 = vsel %vm1196, %v1052, 0.0
  %v1241 = vsel %vm450, %v1239, 0.0
  %v1242 = vadd.f32 %v1237, %v1241
  %v1243 = vrot.slane %v1242, 4
  %v1244 = vadd.f32 %v1242, %v1243
  %v1245 = vrot.slane %v1244, 2
  %v1246 = vadd.f32 %v1244, %v1245
  %v1247 = vrot.slane %v1246, 1
  %v1248 = vadd.f32 %v1246, %v1247
  %v1249 = vsel %vm450, %v1240, 0.0
  %v1250 = vadd.f32 %v1238, %v1249
  %v1251 = vrot.slane %v1250, 4
  %v1252 = vadd.f32 %v1250, %v1251
  %v1253 = vrot.slane %v1252, 2
  %v1254 = vadd.f32 %v1252, %v1253
  %v1255 = vrot.slane %v1254, 1
  %v1256 = vadd.f32 %v1254, %v1255
  %v1257 = vsel %vm1193, 1, 0
  %v1258 = vsel %vm1194, 1, 0
  %v1259 = vsel %vm1195, 1, 0
  %v1260 = vsel %vm1196, 1, 0
  %v1261 = vcvt.s32.f32 %v1257
  %v1262 = vcvt.s32.f32 %v1258
  %v1263 = vcvt.s32.f32 %v1259
  %v1264 = vcvt.s32.f32 %v1260
  %1267 = vrot.lane.b32.xlu0 %v885, 110
  %v1268 = vpop.permute.xlu0 %1267
  %1269 = vrot.lane.b32.xlu0 %v886, 110
  %v1270 = vpop.permute.xlu0 %1269
  %1273 = vxpose.xlu0.b32.start [1/16] %v1268, 128
  %1274 = vxpose.xlu0.b32.cont [2/16] %v1270, 128
  %1275 = vxpose.xlu0.b32.cont [3/16] 0.0, 128
  %1276 = vxpose.xlu0.b32.cont [4/16] 0.0, 128
  %1277 = vxpose.xlu0.b32.cont [5/16] 0.0, 128
  %1278 = vxpose.xlu0.b32.cont [6/16] 0.0, 128
  %1279 = vxpose.xlu0.b32.cont [7/16] 0.0, 128
  %1280 = vxpose.xlu0.b32.cont [8/16] 0.0, 128
  %1281 = vxpose.xlu0.b32.cont [9/16] 0.0, 128
  %1282 = vxpose.xlu0.b32.cont [10/16] 0.0, 128
  %1283 = vxpose.xlu0.b32.cont [11/16] 0.0, 128
  %1284 = vxpose.xlu0.b32.cont [12/16] 0.0, 128
  %1285 = vxpose.xlu0.b32.cont [13/16] 0.0, 128
  %1286 = vxpose.xlu0.b32.cont [14/16] 0.0, 128
  %1287 = vxpose.xlu0.b32.cont [15/16] 0.0, 128
  %1288 = vxpose.xlu0.b32.end [16/16] 0.0, 128
  %v1289 = vpop.trf.xlu0
  %v1290 = vpop.trf.xlu0
  %v1291 = vpop.trf.xlu0
  %v1292 = vpop.trf.xlu0
  %v1293 = vpop.trf.xlu0
  %v1294 = vpop.trf.xlu0
  %v1295 = vpop.trf.xlu0
  %v1296 = vpop.trf.xlu0
  %v1297 = vpop.trf.xlu0
  %v1298 = vpop.trf.xlu0
  %v1299 = vpop.trf.xlu0
  %v1300 = vpop.trf.xlu0
  %v1301 = vpop.trf.xlu0
  %v1302 = vpop.trf.xlu0
  %v1303 = vpop.trf.xlu0
  %v1304 = vpop.trf.xlu0
  %v1306 = vsel %vm601, %v1289, 0
  %v1309 = vsel %vm601, %v1290, 0
  %v1312 = vsel %vm450, %v1263, 0
  %v1315 = vsel %vm450, %v1264, 0
  %1317 = vmatprep.subr.mxu0 0.0
  %1318 = vmatpush1.msra.mxu0 0.0
  %1319 = vmatprep.subr.mxu0 0.0
  %1320 = vmatpush1.msra.mxu0 0.0
  %1321 = vmatprep.subr.mxu0 0.0
  %1322 = vmatpush1.msra.mxu0 0.0
  %1323 = vmatprep.subr.mxu0 0.0
  %1324 = vmatpush1.msra.mxu0 0.0
  %1325 = vmatprep.subr.mxu0 0.0
  %1326 = vmatpush1.msra.mxu0 0.0
  %1327 = vmatprep.subr.mxu0 0.0
  %1328 = vmatpush1.msra.mxu0 0.0
  %1329 = vmatprep.subr.mxu0 0.0
  %1330 = vmatpush1.msra.mxu0 0.0
  %1331 = vmatprep.subr.mxu0 0.0
  %1332 = vmatpush1.msra.mxu0 0.0
  %1333 = vmatprep.subr.mxu0 0.0
  %1334 = vmatpush1.msra.mxu0 0.0
  %1335 = vmatprep.subr.mxu0 0.0
  %1336 = vmatpush1.msra.mxu0 0.0
  %1337 = vmatprep.subr.mxu0 0.0
  %1338 = vmatpush1.msra.mxu0 0.0
  %1339 = vmatprep.subr.mxu0 0.0
  %1340 = vmatpush1.msra.mxu0 0.0
  %1341 = vmatprep.subr.mxu0 0.0
  %1342 = vmatpush1.msra.mxu0 0.0
  %1343 = vmatprep.subr.mxu0 0.0
  %1344 = vmatpush1.msra.mxu0 0.0
  %1345 = vmatprep.subr.mxu0 %v1315
  %1346 = vmatpush1.msra.mxu0 %v1312
  %1347 = vmatprep.subr.mxu0 %v1262
  %1348 = vmatpush1.msra.mxu0 %v1261
  %1349 = vmatprep.subr.mxu0 0.0
  %1350 = vmatpush2.msra.mxu0 0.0
  %1351 = vmatprep.subr.mxu0 0.0
  %1352 = vmatpush2.msra.mxu0 0.0
  %1353 = vmatprep.subr.mxu0 0.0
  %1354 = vmatpush2.msra.mxu0 0.0
  %1355 = vmatprep.subr.mxu0 0.0
  %1356 = vmatpush2.msra.mxu0 0.0
  %1357 = vmatprep.subr.mxu0 0.0
  %1358 = vmatpush2.msra.mxu0 0.0
  %1359 = vmatprep.subr.mxu0 0.0
  %1360 = vmatpush2.msra.mxu0 0.0
  %1361 = vmatprep.subr.mxu0 0.0
  %1362 = vmatpush2.msra.mxu0 0.0
  %1363 = vmatprep.subr.mxu0 0.0
  %1364 = vmatpush2.msra.mxu0 0.0
  %1365 = vmatprep.subr.mxu0 0.0
  %1366 = vmatpush2.msra.mxu0 0.0
  %1367 = vmatprep.subr.mxu0 0.0
  %1368 = vmatpush2.msra.mxu0 0.0
  %1369 = vmatprep.subr.mxu0 0.0
  %1370 = vmatpush2.msra.mxu0 0.0
  %1371 = vmatprep.subr.mxu0 0.0
  %1372 = vmatpush2.msra.mxu0 0.0
  %1373 = vmatprep.subr.mxu0 0.0
  %1374 = vmatpush2.msra.mxu0 0.0
  %1375 = vmatprep.subr.mxu0 0.0
  %1376 = vmatpush2.msra.mxu0 0.0
  %1377 = vmatprep.subr.mxu0 0.0
  %1378 = vmatpush2.msra.mxu0 0.0
  %1379 = vmatprep.subr.mxu0 0.0
  %1380 = vmatpush2.msra.mxu0 0.0
  %1381 = vmatprep.mubr.f32.mxu0 0.0
  %1382 = vmatmul.mubr.f32.gmra.mxu0 %v1306
  %v1383 = vpop.f32.mrf.mxu0
  %v1384 = vadd.f32 0.0, %v1383
  %v1385 = vpop.f32.mrf.mxu0
  %v1386 = vadd.f32 0.0, %v1385
  %1387 = vmatprep.mubr.f32.mxu0 0.0
  %1388 = vmatmul.mubr.f32.gmra.mxu0 %v1309
  %v1389 = vpop.f32.mrf.mxu0
  %v1390 = vadd.f32 0.0, %v1389
  %v1391 = vpop.f32.mrf.mxu0
  %v1392 = vadd.f32 0.0, %v1391
  %1393 = vdwg.mxu0
  %v1394 = vmul.f32 %v1384, %v1208
  %v1395 = vmul.f32 %v1386, %v1216
  %v1396 = vmul.f32 %v1384, %v1228
  %v1397 = vmul.f32 %v1386, %v1236
  %v1400 = vrot.slane %v1396, 3
  %v1401 = vrot.slane %v1397, 3
  %v1404 = vadd.f32 %v1394, %v1400
  %v1405 = vadd.f32 %v1395, %v1401
  %v1406 = vmul.f32 %v1384, %v1248
  %v1407 = vmul.f32 %v1386, %v1256
  %v1410 = vrot.slane %v1406, 6
  %v1411 = vrot.slane %v1407, 6
  %v1414 = vadd.f32 %v1404, %v1410
  %v1415 = vadd.f32 %v1405, %v1411
  %v1416 = vsel %vm1179, %v1414, 1.0
  %v1417 = vsel %vm1180, %v1415, 1.0
  %v1418 = vmul.f32 %v1390, %v1248
  %v1419 = vmul.f32 %v1392, %v1256
  %v1422 = vrot.slane %v1418, 6
  %v1423 = vrot.slane %v1419, 6
  %v1426 = vadd.f32 %v1404, %v1422
  %v1427 = vadd.f32 %v1405, %v1423
  %v1428 = vsel %vm1179, %v1426, 1.0
  %v1429 = vsel %vm1180, %v1427, 1.0
  %v1430 = vsel %vm1179, %v1185, -1.0
  %v1431 = vsel %vm1180, %v1186, -1.0
  %v1432 = vsel %vm1179, %v1208, -1.0
  %v1433 = vsel %vm1180, %v1216, -1.0
  %v1434 = vsel %vm1179, %v1228, -1.0
  %v1435 = vsel %vm1180, %v1236, -1.0
  %v1436 = vsel %vm1179, %v1248, -1.0
  %v1437 = vsel %vm1180, %v1256, -1.0
  %v1440 = vsel %vm737, %v1416, %v1428
  %v1441 = vsel %vm737, %v1417, %v1429
  %v1442 = vsel %vm740, %v1440, %v1430
  %v1443 = vsel %vm740, %v1441, %v1431
  %v1444 = vsel %vm450, %v1442, %v1432
  %v1445 = vsel %vm450, %v1443, %v1433
  %v1446 = vsel %vm745, %v1444, %v1434
  %v1447 = vsel %vm745, %v1445, %v1435
  %v1448 = vsel %vm748, %v1446, %v1436
  %v1449 = vsel %vm748, %v1447, %v1437
  %v1450 = vsel %vm751, %v1448, %v1183
  %v1451 = vsel %vm751, %v1449, %v1184
  %s1452 = scalar_lea.vmem %s2, 16
  %1453 = vst [vmem:[%s1452] sm:$0xff] %v1450
  %1454 = vst [vmem:[%s1452 + $0x8] sm:$0xff] %v1451
  // Predicated region
  $region10: #{mesh_renderer_with_fragments.1} parent=0 // pred_check
    _
  $region11: #{mesh_renderer_with_fragments.1} parent=0 // pred_check_branch
    %1456 = sbr.rel (0) target = $region13
  $region12: #{mesh_renderer_with_fragments.1} parent=0 // pred_region
    _
  $region13: #{mesh_renderer_with_fragments.1} parent=0 // pred_fallthru
    _
  // Predicated region
  $region14: #{mesh_renderer_with_fragments.1} parent=0 // pred_check
    _
  $region15: #{mesh_renderer_with_fragments.1} parent=0 // pred_check_branch
    %1458 = sbr.rel (0) target = $region17
  $region16: #{mesh_renderer_with_fragments.1} parent=0 // pred_region
    _
  $region17: #{mesh_renderer_with_fragments.1} parent=0 // pred_fallthru
    _

</llo_original>
